<compile_context>
chip_gen: v6e
topology: v6e:2x2x1
jax: 0.10.0
libtpu: 0.0.40
codegen_flags: <defaults>
</compile_context>

<pallas_src>
import functools

import jax
import jax.numpy as jnp
import numpy as np
from jax import lax
from jax.experimental import pallas as pl
from jax.experimental.pallas import tpu as pltpu

C1, C2, C3, H1, H2 = 64, 128, 512, 256, 128


# ------------------------------ Pallas kernel ---------------------------------

def _pool_kernel(x_ref, w1_ref, b1_ref, w2_ref, b2_ref, w3_ref, b3_ref,
                 out_ref, *, input_dim, n_total, tile_n, tiles_per_split,
                 num_valid_tiles, mask_needed):
    """Shared-MLP stack + running max/min pool, channel-major.

    x_ref:   (1, D, tile_n) f32, native NCW layout (points lane-dense).
    w*_ref:  transposed, BN-folded weights; biases as (C, 1) columns.
    out_ref: (1, 1, C3, 2) f32 accumulator block; lane 0 = running max of the
             pre-BN3 activations, lane 1 = running min.  BN3 affine + head are
             applied post-pool in the wrapper.
    """
    s = pl.program_id(1)
    n = pl.program_id(2)

    lane = lax.broadcasted_iota(jnp.int32, (C3, 2), 1)

    @pl.when(n == 0)
    def _():
        out_ref[0, 0] = jnp.where(lane == 0,
                                  jnp.float32(-jnp.inf), jnp.float32(jnp.inf))

    x = x_ref[0]                                    # (D, tile_n) f32

    if mask_needed:
        # Ragged last tile / clamped duplicate tiles: replace invalid point
        # columns with column 0 (always valid) BEFORE any arithmetic, so
        # garbage never reaches the pool and duplicates leave max/min intact.
        t = jnp.minimum(s * tiles_per_split + n, num_valid_tiles - 1)
        valid = jnp.minimum(n_total - t * tile_n, tile_n)
        col = lax.broadcasted_iota(jnp.int32, (1, tile_n), 1)
        x = jnp.where(col < valid, x, x[:, 0:1])

    # Layer 1: Conv1d(k=1) with K = input_dim (tiny) -> broadcast FMAs on the
    # VPU instead of a pathological padded MXU matmul.  BN1 folded ahead.
    h = b1_ref[...] + w1_ref[:, 0:1] * x[0:1, :]
    for k in range(1, input_dim):
        h = h + w1_ref[:, k:k + 1] * x[k:k + 1, :]
    h = jnp.maximum(h, 0.0)                         # (C1, tile_n) f32

    # Layer 2: (C2, C1) @ (C1, tile_n); bf16 inputs, f32 accumulate.  BN2 ahead.
    h = jnp.maximum(
        jnp.dot(w2_ref[...], h.astype(w2_ref.dtype),
                preferred_element_type=jnp.float32) + b2_ref[...], 0.0)

    # Layer 3: (C3, C2) @ (C2, tile_n); bf16 inputs, f32 accumulate.
    h = jnp.maximum(
        jnp.dot(w3_ref[...], h.astype(w3_ref.dtype),
                preferred_element_type=jnp.float32) + b3_ref[...], 0.0)

    # Running max / min of the pre-BN3 activations (XLU lane reduces; the BN3
    # affine is applied once, post-pool, in the wrapper).
    mx = jnp.max(h, axis=1, keepdims=True)          # (C3, 1)
    mn = jnp.min(h, axis=1, keepdims=True)          # (C3, 1)
    ext = jnp.where(lane == 0, mx, mn)              # (C3, 2)
    cur = out_ref[0, 0]
    out_ref[0, 0] = jnp.where(lane == 0, jnp.maximum(cur, ext),
                              jnp.minimum(cur, ext))


# ---------------------------- parameter folding -------------------------------

def fold_params(P, D, matmul_dtype=jnp.bfloat16):
    """Fold eval-BN affines / biases into the next layer's weights, transpose
    the shared-MLP weights to channel-major, and fold the identity matrix into
    the final FC bias.  matmul_dtype controls the MXU weight storage dtype."""
    dd = D * D
    f32 = jnp.float32

    w1T = P['w1'].astype(f32).T                               # (C1, D)
    b1c = P['b1'].astype(f32).reshape(-1, 1)                  # (C1, 1)
    w2T = (P['w2'] * P['s1'].T).T.astype(matmul_dtype)        # (C2, C1)
    b2c = (P['b2'] + P['t1'] @ P['w2']).reshape(-1, 1).astype(f32)
    w3T = (P['w3'] * P['s2'].T).T.astype(matmul_dtype)        # (C3, C2)
    b3c = (P['b3'] + P['t2'] @ P['w3']).reshape(-1, 1).astype(f32)
    s3 = P['s3'].astype(f32)                                  # (1, C3)
    t3 = P['t3'].astype(f32)

    # Head (tiny, runs in plain XLA): keep f32, fold BN4/BN5 + identity.
    v1 = P['v1'].astype(f32)                                  # (C3, H1)
    v2f = (P['v2'] * P['s4'].T).astype(f32)                   # (H1, H2)
    b5f = (P['t4'] @ P['v2']).astype(f32)                     # (1, H2)
    wfcf = (P['wfc'] * P['s5'].T).astype(f32)                 # (H2, dd)
    bfcf = (P['bfc'] + P['t5'] @ P['wfc']
            + jnp.eye(D, dtype=f32).reshape(1, dd)).astype(f32)

    return dict(w1T=w1T, b1c=b1c, w2T=w2T, b2c=b2c, w3T=w3T, b3c=b3c,
                s3=s3, t3=t3, v1=v1, v2f=v2f, b5f=b5f, wfcf=wfcf, bfcf=bfcf)


# --------------------------------- wrapper -------------------------------------

def tnet_forward(x_ncw, params, *, matmul_dtype=jnp.bfloat16, tile_n=None,
                 n_split=None):
    """x_ncw: (B, D, N) float32 (PyTorch Conv1d NCW layout). Returns (B, D, D)."""
    B, D, N = x_ncw.shape
    dd = D * D
    fp = fold_params(params, D, matmul_dtype)

    # Point-tile selection: lane-dense tiles, multiples of 128 unless the whole
    # cloud fits one block.
    if tile_n is None:
        tile_n = N if N <= 2048 else 2048
    else:
        tile_n = min(tile_n, N)
    if tile_n < N:
        tile_n = max(128, (tile_n // 128) * 128)
    num_tiles = pl.cdiv(N, tile_n)

    # Optional point-split parallel axis: lets both v7x TensorCores work when
    # B == 1 (harmless on 1-TC chips).
    if n_split is None:
        n_split = 2 if (B == 1 and num_tiles > 1) else 1
    n_split = max(1, min(n_split, num_tiles))
    tps = pl.cdiv(num_tiles, n_split)

    mask_needed = (N % tile_n != 0) or (tps * n_split != num_tiles)

    x = x_ncw.astype(jnp.float32)            # native layout, no transpose/pad

    pool_params = [fp[k] for k in ('w1T', 'b1c', 'w2T', 'b2c', 'w3T', 'b3c')]

    def _x_map(b, s, n):
        t = jnp.minimum(s * tps + n, num_tiles - 1)   # clamp padded grid slots
        return (b, 0, t)

    def _p_map(b, s, n):
        return (0, 0)

    def _o_map(b, s, n):
        return (b, s, 0, 0)

    kernel = functools.partial(
        _pool_kernel, input_dim=D, n_total=N, tile_n=tile_n,
        tiles_per_split=tps, num_valid_tiles=num_tiles, mask_needed=mask_needed)

    flops = int(2 * B * N * (D * C1 + C1 * C2 + C2 * C3))
    bytes_accessed = int(
        x.size * 4
        + sum(int(p.size) * p.dtype.itemsize for p in pool_params)
        + B * n_split * C3 * 2 * 4)
    # VMEM budget: ~3.3 KiB per tile point of intermediates + ~2 MiB weights.
    # Keep >= 32 MiB (bumps v5e's 16 MiB scoped default), <= 48 MiB (headroom
    # against v7x's 64 MiB physical VMEM).
    vmem_limit = int(min(48 << 20, max(32 << 20, 4096 * tile_n + (8 << 20))))

    pooled = pl.pallas_call(
        kernel,
        out_shape=jax.ShapeDtypeStruct((B, n_split, C3, 2), jnp.float32),
        grid=(B, n_split, tps),
        in_specs=[pl.BlockSpec((1, D, tile_n), _x_map)]
                 + [pl.BlockSpec(p.shape, _p_map) for p in pool_params],
        out_specs=pl.BlockSpec((1, 1, C3, 2), _o_map),
        compiler_params=pltpu.CompilerParams(
            dimension_semantics=("parallel", "parallel", "arbitrary"),
            vmem_limit_bytes=vmem_limit),
        cost_estimate=pl.CostEstimate(flops=flops, transcendentals=0,
                                      bytes_accessed=bytes_accessed),
    )(x, *pool_params)

    # Combine per-split partial extrema; apply BN3 affine post-pool (max/min
    # commute with a monotone affine, sign of the scale selects which one).
    mx = jnp.max(pooled[..., 0], axis=1)                      # (B, C3)
    mn = jnp.min(pooled[..., 1], axis=1)                      # (B, C3)
    s3, t3 = fp['s3'], fp['t3']
    g = jnp.where(s3 >= 0.0, s3 * mx + t3, s3 * mn + t3)

    # Post-pool head (~180K MACs/sample) in plain XLA; BN4/BN5 + identity folded.
    h = jnp.maximum(g @ fp['v1'], 0.0)
    h = jnp.maximum(h @ fp['v2f'] + fp['b5f'], 0.0)
    # TODO(synk): training-mode dropout (stochastic masking) not implemented.
    out = h @ fp['wfcf'] + fp['bfcf']
    return out.reshape(B, D, D)


# ------------------------------ parameter init ---------------------------------

def init_params(key, D, eps=1e-5):
    dd = D * D
    ks = list(jax.random.split(key, 16))

    def lin(k, i, o, scale=0.1):
        return (scale * jax.random.normal(k, (i, o))).astype(jnp.float32)

    def bias(k, o, scale=0.05):
        return (scale * jax.random.normal(k, (1, o))).astype(jnp.float32)

    def bn(k, c):
        k1, k2, k3, k4 = jax.random.split(k, 4)
        gamma = 1.0 + 0.1 * jax.random.normal(k1, (1, c))
        beta = 0.1 * jax.random.normal(k2, (1, c))
        mean = 0.1 * jax.random.normal(k3, (1, c))
        var = jnp.abs(jax.random.normal(k4, (1, c))) + 0.5
        scale = gamma / jnp.sqrt(var + eps)
        shift = beta - mean * scale
        return scale.astype(jnp.float32), shift.astype(jnp.float32)

    P = {}
    P['w1'] = lin(ks[0], D, C1);   P['b1'] = bias(ks[1], C1)
    P['s1'], P['t1'] = bn(ks[2], C1)
    P['w2'] = lin(ks[3], C1, C2);  P['b2'] = bias(ks[4], C2)
    P['s2'], P['t2'] = bn(ks[5], C2)
    P['w3'] = lin(ks[6], C2, C3);  P['b3'] = bias(ks[7], C3)
    P['s3'], P['t3'] = bn(ks[8], C3)
    P['v1'] = lin(ks[9], C3, H1);  P['s4'], P['t4'] = bn(ks[10], H1)
    P['v2'] = lin(ks[11], H1, H2); P['s5'], P['t5'] = bn(ks[12], H2)
    P['wfc'] = lin(ks[13], H2, dd); P['bfc'] = bias(ks[14], dd)
    return P


# ---------------------------- pure-JAX reference --------------------------------

def tnet_ref(x_ncw, P):
    B, D, N = x_ncw.shape
    x = jnp.transpose(x_ncw, (0, 2, 1)).astype(jnp.float32)   # (B, N, D)
    h = jnp.maximum(x @ P['w1'] + P['b1'], 0.0) * P['s1'] + P['t1']
    h = jnp.maximum(h @ P['w2'] + P['b2'], 0.0) * P['s2'] + P['t2']
    h = jnp.maximum(h @ P['w3'] + P['b3'], 0.0) * P['s3'] + P['t3']
    g = jnp.max(h, axis=1)                                    # (B, 512)
    g = jnp.maximum(g @ P['v1'], 0.0) * P['s4'] + P['t4']
    g = jnp.maximum(g @ P['v2'], 0.0) * P['s5'] + P['t5']
    o = g @ P['wfc'] + P['bfc']
    return o.reshape(B, D, D) + jnp.eye(D, dtype=jnp.float32)


# ----------------------------------- main ---------------------------------------

if __name__ == "__main__":
    key = jax.random.PRNGKey(0)
    k_p, k1, k2, k3 = jax.random.split(key, 4)
    D = 3
    params = init_params(k_p, D)

    # Case 1: f32 matmul path, whole point cloud in one tile (tight tolerance).
    B, N = 2, 16
    x = jax.random.normal(k1, (B, D, N), dtype=jnp.float32)   # PyTorch NCW layout
    out = jax.block_until_ready(tnet_forward(x, params, matmul_dtype=jnp.float32))
    assert out.shape == (B, D, D)
    np.testing.assert_allclose(np.asarray(out), np.asarray(tnet_ref(x, params)),
                               rtol=5e-3, atol=5e-4)

    # Case 2: default bf16 path, multiple evenly-divided point tiles.
    B2, N2 = 2, 256
    x2 = jax.random.normal(k2, (B2, D, N2), dtype=jnp.float32)
    out2 = jax.block_until_ready(tnet_forward(x2, params, tile_n=128))
    np.testing.assert_allclose(np.asarray(out2), np.asarray(tnet_ref(x2, params)),
                               rtol=5e-2, atol=5e-2)

    # Case 3: bf16 path, B=1 (auto point-split -> both grid splits), ragged
    # last tile + clamped duplicate grid slot (3 real tiles over a 2x2 split).
    B3, N3 = 1, 300
    x3 = jax.random.normal(k3, (B3, D, N3), dtype=jnp.float32)
    out3 = jax.block_until_ready(tnet_forward(x3, params, tile_n=128))
    np.testing.assert_allclose(np.asarray(out3), np.asarray(tnet_ref(x3, params)),
                               rtol=5e-2, atol=5e-2)

    print("KERNEL_OK")
</pallas_src>

<mosaic_0001>
module attributes {stable_mosaic.version = 11 : i64} {
  func.func @_pool_kernel(%arg0: i32, %arg1: i32, %arg2: i32, %arg3: memref<1x3x16xf32, #tpu.memory_space<vmem>>, %arg4: memref<64x3xf32, #tpu.memory_space<vmem>>, %arg5: memref<64x1xf32, #tpu.memory_space<vmem>>, %arg6: memref<128x64xf32, #tpu.memory_space<vmem>>, %arg7: memref<128x1xf32, #tpu.memory_space<vmem>>, %arg8: memref<512x128xf32, #tpu.memory_space<vmem>>, %arg9: memref<512x1xf32, #tpu.memory_space<vmem>>, %arg10: memref<1x1x512x2xf32, #tpu.memory_space<vmem>>) attributes {dimension_semantics = [#tpu.dimension_semantics<parallel>, #tpu.dimension_semantics<parallel>, #tpu.dimension_semantics<arbitrary>], iteration_bounds = array<i64: 2, 1, 1>, scalar_prefetch = 0 : i64, scratch_operands = 0 : i64, tpu.core_type = #tpu.core_type<tc>, window_params = [{transform_indices = @transform_0, window_bounds = array<i64: 1, 3, 16>}, {pipeline_mode = #tpu.pipeline_mode<synchronous>, transform_indices = @transform_1, window_bounds = array<i64: 64, 3>}, {pipeline_mode = #tpu.pipeline_mode<synchronous>, transform_indices = @transform_2, window_bounds = array<i64: 64, 1>}, {pipeline_mode = #tpu.pipeline_mode<synchronous>, transform_indices = @transform_3, window_bounds = array<i64: 128, 64>}, {pipeline_mode = #tpu.pipeline_mode<synchronous>, transform_indices = @transform_4, window_bounds = array<i64: 128, 1>}, {pipeline_mode = #tpu.pipeline_mode<synchronous>, transform_indices = @transform_5, window_bounds = array<i64: 512, 128>}, {pipeline_mode = #tpu.pipeline_mode<synchronous>, transform_indices = @transform_6, window_bounds = array<i64: 512, 1>}, {transform_indices = @transform_7, window_bounds = array<i64: 1, 1, 512, 2>}]} {
    %0 = tpu.iota {dimensions = array<i32: 1>} : vector<512x2xi32>
    %c0_i32 = arith.constant 0 : i32
    %1 = arith.cmpi eq, %arg2, %c0_i32 : i32
    %2 = arith.extui %1 : i1 to i32
    %c0_i32_0 = arith.constant 0 : i32
    %3 = arith.cmpi ne, %2, %c0_i32_0 : i32
    scf.if %3 {
      %c0_i32_33 = arith.constant 0 : i32
      %63 = vector.broadcast %c0_i32_33 : i32 to vector<512x2xi32>
      %64 = arith.cmpi eq, %0, %63 : vector<512x2xi32>
      %cst_34 = arith.constant 0xFF800000 : f32
      %cst_35 = arith.constant 0x7F800000 : f32
      %65 = vector.broadcast %cst_34 : f32 to vector<512x2xf32>
      %66 = vector.broadcast %cst_35 : f32 to vector<512x2xf32>
      %67 = arith.select %64, %65, %66 : vector<512x2xi1>, vector<512x2xf32>
      %c0_36 = arith.constant 0 : index
      %c0_37 = arith.constant 0 : index
      %c0_38 = arith.constant 0 : index
      %c0_39 = arith.constant 0 : index
      %68 = vector.load %arg10[%c0_36, %c0_37, %c0_38, %c0_39] : memref<1x1x512x2xf32, #tpu.memory_space<vmem>>, vector<1x1x512x2xf32>
      %69 = vector.shape_cast %68 : vector<1x1x512x2xf32> to vector<512x2xf32>
      %70 = vector.shape_cast %67 : vector<512x2xf32> to vector<1x1x512x2xf32>
      tpu.vector_store %arg10[%c0_36, %c0_37, %c0_38, %c0_39], %70 {strides = array<i32>} : memref<1x1x512x2xf32, #tpu.memory_space<vmem>>, vector<1x1x512x2xf32>,
    } else {
    }
    %c0 = arith.constant 0 : index
    %c0_1 = arith.constant 0 : index
    %c0_2 = arith.constant 0 : index
    %4 = vector.load %arg3[%c0, %c0_1, %c0_2] : memref<1x3x16xf32, #tpu.memory_space<vmem>>, vector<1x3x16xf32>
    %5 = vector.shape_cast %4 : vector<1x3x16xf32> to vector<3x16xf32>
    %c0_3 = arith.constant 0 : index
    %c0_4 = arith.constant 0 : index
    %6 = vector.load %arg5[%c0_3, %c0_4] : memref<64x1xf32, #tpu.memory_space<vmem>>, vector<64x1xf32>
    %c0_5 = arith.constant 0 : index
    %c0_6 = arith.constant 0 : index
    %7 = vector.load %arg4[%c0_5, %c0_6] : memref<64x3xf32, #tpu.memory_space<vmem>>, vector<64x1xf32>
    %8 = vector.extract_strided_slice %5 {offsets = [0, 0], sizes = [1, 16], strides = [1, 1]} : vector<3x16xf32> to vector<1x16xf32>
    %9 = vector.broadcast %7 : vector<64x1xf32> to vector<64x16xf32>
    %10 = vector.broadcast %8 : vector<1x16xf32> to vector<64x16xf32>
    %11 = arith.mulf %9, %10 : vector<64x16xf32>
    %12 = vector.broadcast %6 : vector<64x1xf32> to vector<64x16xf32>
    %13 = arith.addf %12, %11 : vector<64x16xf32>
    %c0_7 = arith.constant 0 : index
    %c1 = arith.constant 1 : index
    %14 = vector.load %arg4[%c0_7, %c1] : memref<64x3xf32, #tpu.memory_space<vmem>>, vector<64x1xf32>
    %15 = vector.extract_strided_slice %5 {offsets = [1, 0], sizes = [1, 16], strides = [1, 1]} : vector<3x16xf32> to vector<1x16xf32>
    %16 = vector.broadcast %14 : vector<64x1xf32> to vector<64x16xf32>
    %17 = vector.broadcast %15 : vector<1x16xf32> to vector<64x16xf32>
    %18 = arith.mulf %16, %17 : vector<64x16xf32>
    %19 = arith.addf %13, %18 : vector<64x16xf32>
    %c0_8 = arith.constant 0 : index
    %c2 = arith.constant 2 : index
    %20 = vector.load %arg4[%c0_8, %c2] : memref<64x3xf32, #tpu.memory_space<vmem>>, vector<64x1xf32>
    %21 = vector.extract_strided_slice %5 {offsets = [2, 0], sizes = [1, 16], strides = [1, 1]} : vector<3x16xf32> to vector<1x16xf32>
    %22 = vector.broadcast %20 : vector<64x1xf32> to vector<64x16xf32>
    %23 = vector.broadcast %21 : vector<1x16xf32> to vector<64x16xf32>
    %24 = arith.mulf %22, %23 : vector<64x16xf32>
    %25 = arith.addf %19, %24 : vector<64x16xf32>
    %cst = arith.constant 0.000000e+00 : f32
    %26 = vector.broadcast %cst : f32 to vector<64x16xf32>
    %27 = arith.maximumf %25, %26 : vector<64x16xf32>
    %c0_9 = arith.constant 0 : index
    %c0_10 = arith.constant 0 : index
    %28 = vector.load %arg6[%c0_9, %c0_10] : memref<128x64xf32, #tpu.memory_space<vmem>>, vector<128x64xf32>
    %cst_11 = arith.constant dense<0.000000e+00> : vector<128x16xf32>
    %29 = tpu.matmul %28, %27, %cst_11 {dimension_numbers = #tpu.dot_dimension_numbers<[1], [0], [0], [1], [0, 0, 1, 1], [], []>} : vector<128x64xf32>, vector<64x16xf32>, vector<128x16xf32> -> vector<128x16xf32>
    %c0_12 = arith.constant 0 : index
    %c0_13 = arith.constant 0 : index
    %30 = vector.load %arg7[%c0_12, %c0_13] : memref<128x1xf32, #tpu.memory_space<vmem>>, vector<128x1xf32>
    %31 = vector.broadcast %30 : vector<128x1xf32> to vector<128x16xf32>
    %32 = arith.addf %29, %31 : vector<128x16xf32>
    %cst_14 = arith.constant 0.000000e+00 : f32
    %33 = vector.broadcast %cst_14 : f32 to vector<128x16xf32>
    %34 = arith.maximumf %32, %33 : vector<128x16xf32>
    %c0_15 = arith.constant 0 : index
    %c0_16 = arith.constant 0 : index
    %35 = vector.load %arg8[%c0_15, %c0_16] : memref<512x128xf32, #tpu.memory_space<vmem>>, vector<512x128xf32>
    %cst_17 = arith.constant dense<0.000000e+00> : vector<512x16xf32>
    %36 = tpu.matmul %35, %34, %cst_17 {dimension_numbers = #tpu.dot_dimension_numbers<[1], [0], [0], [1], [0, 0, 1, 1], [], []>} : vector<512x128xf32>, vector<128x16xf32>, vector<512x16xf32> -> vector<512x16xf32>
    %c0_18 = arith.constant 0 : index
    %c0_19 = arith.constant 0 : index
    %37 = vector.load %arg9[%c0_18, %c0_19] : memref<512x1xf32, #tpu.memory_space<vmem>>, vector<512x1xf32>
    %38 = vector.broadcast %37 : vector<512x1xf32> to vector<512x16xf32>
    %39 = arith.addf %36, %38 : vector<512x16xf32>
    %cst_20 = arith.constant 0.000000e+00 : f32
    %40 = vector.broadcast %cst_20 : f32 to vector<512x16xf32>
    %41 = arith.maximumf %39, %40 : vector<512x16xf32>
    %cst_21 = arith.constant dense<0xFF800000> : vector<512xf32>
    %42 = vector.multi_reduction <maximumf>, %41, %cst_21 [1] : vector<512x16xf32> to vector<512xf32>
    %43 = vector.shape_cast %42 : vector<512xf32> to vector<512x1xf32>
    %cst_22 = arith.constant dense<0x7F800000> : vector<512xf32>
    %44 = vector.multi_reduction <minimumf>, %41, %cst_22 [1] : vector<512x16xf32> to vector<512xf32>
    %45 = vector.shape_cast %44 : vector<512xf32> to vector<512x1xf32>
    %c0_i32_23 = arith.constant 0 : i32
    %46 = vector.broadcast %c0_i32_23 : i32 to vector<512x2xi32>
    %47 = arith.cmpi eq, %0, %46 : vector<512x2xi32>
    %48 = vector.shape_cast %43 : vector<512x1xf32> to vector<512x1xf32>
    %49 = vector.broadcast %48 : vector<512x1xf32> to vector<512x2xf32>
    %50 = vector.shape_cast %45 : vector<512x1xf32> to vector<512x1xf32>
    %51 = vector.broadcast %50 : vector<512x1xf32> to vector<512x2xf32>
    %52 = arith.select %47, %49, %51 : vector<512x2xi1>, vector<512x2xf32>
    %c0_24 = arith.constant 0 : index
    %c0_25 = arith.constant 0 : index
    %c0_26 = arith.constant 0 : index
    %c0_27 = arith.constant 0 : index
    %53 = vector.load %arg10[%c0_24, %c0_25, %c0_26, %c0_27] : memref<1x1x512x2xf32, #tpu.memory_space<vmem>>, vector<1x1x512x2xf32>
    %54 = vector.shape_cast %53 : vector<1x1x512x2xf32> to vector<512x2xf32>
    %c0_i32_28 = arith.constant 0 : i32
    %55 = vector.broadcast %c0_i32_28 : i32 to vector<512x2xi32>
    %56 = arith.cmpi eq, %0, %55 : vector<512x2xi32>
    %57 = arith.maximumf %54, %52 : vector<512x2xf32>
    %58 = arith.minimumf %54, %52 : vector<512x2xf32>
    %59 = arith.select %56, %57, %58 : vector<512x2xi1>, vector<512x2xf32>
    %c0_29 = arith.constant 0 : index
    %c0_30 = arith.constant 0 : index
    %c0_31 = arith.constant 0 : index
    %c0_32 = arith.constant 0 : index
    %60 = vector.load %arg10[%c0_29, %c0_30, %c0_31, %c0_32] : memref<1x1x512x2xf32, #tpu.memory_space<vmem>>, vector<1x1x512x2xf32>
    %61 = vector.shape_cast %60 : vector<1x1x512x2xf32> to vector<512x2xf32>
    %62 = vector.shape_cast %59 : vector<512x2xf32> to vector<1x1x512x2xf32>
    tpu.vector_store %arg10[%c0_29, %c0_30, %c0_31, %c0_32], %62 {strides = array<i32>} : memref<1x1x512x2xf32, #tpu.memory_space<vmem>>, vector<1x1x512x2xf32>,
    return
  }
  func.func @transform_0(%arg0: i32, %arg1: i32, %arg2: i32) -> (i32, i32, i32) {
    %c1_i32 = arith.constant 1 : i32
    %0 = arith.muli %arg1, %c1_i32 : i32
    %1 = arith.addi %0, %arg2 : i32
    %c0_i32 = arith.constant 0 : i32
    %2 = arith.minsi %1, %c0_i32 : i32
    %c0_i32_0 = arith.constant 0 : i32
    %c0_i32_1 = arith.constant 0 : i32
    return %arg0, %c0_i32_0, %2 : i32, i32, i32
  }
  func.func @transform_1(%arg0: i32, %arg1: i32, %arg2: i32) -> (i32, i32) {
    %c0_i32 = arith.constant 0 : i32
    %c0_i32_0 = arith.constant 0 : i32
    %c0_i32_1 = arith.constant 0 : i32
    return %c0_i32, %c0_i32_0 : i32, i32
  }
  func.func @transform_2(%arg0: i32, %arg1: i32, %arg2: i32) -> (i32, i32) {
    %c0_i32 = arith.constant 0 : i32
    %c0_i32_0 = arith.constant 0 : i32
    %c0_i32_1 = arith.constant 0 : i32
    return %c0_i32, %c0_i32_0 : i32, i32
  }
  func.func @transform_3(%arg0: i32, %arg1: i32, %arg2: i32) -> (i32, i32) {
    %c0_i32 = arith.constant 0 : i32
    %c0_i32_0 = arith.constant 0 : i32
    %c0_i32_1 = arith.constant 0 : i32
    return %c0_i32, %c0_i32_0 : i32, i32
  }
  func.func @transform_4(%arg0: i32, %arg1: i32, %arg2: i32) -> (i32, i32) {
    %c0_i32 = arith.constant 0 : i32
    %c0_i32_0 = arith.constant 0 : i32
    %c0_i32_1 = arith.constant 0 : i32
    return %c0_i32, %c0_i32_0 : i32, i32
  }
  func.func @transform_5(%arg0: i32, %arg1: i32, %arg2: i32) -> (i32, i32) {
    %c0_i32 = arith.constant 0 : i32
    %c0_i32_0 = arith.constant 0 : i32
    %c0_i32_1 = arith.constant 0 : i32
    return %c0_i32, %c0_i32_0 : i32, i32
  }
  func.func @transform_6(%arg0: i32, %arg1: i32, %arg2: i32) -> (i32, i32) {
    %c0_i32 = arith.constant 0 : i32
    %c0_i32_0 = arith.constant 0 : i32
    %c0_i32_1 = arith.constant 0 : i32
    return %c0_i32, %c0_i32_0 : i32, i32
  }
  func.func @transform_7(%arg0: i32, %arg1: i32, %arg2: i32) -> (i32, i32, i32, i32) {
    %c0_i32 = arith.constant 0 : i32
    %c0_i32_0 = arith.constant 0 : i32
    %c0_i32_1 = arith.constant 0 : i32
    return %arg0, %arg1, %c0_i32, %c0_i32_0 : i32, i32, i32, i32
  }
}

</mosaic_0001>

<llo_original>
// kernel: tpu_custom_call.1
$region0: #{tpu_custom_call.1}
  #allocation0 [shape = 'u32[]', space=smem, size = 0x4, offset = 0x4, fixed_abs, tag = 'smem constant byte address 0x4 - core index']
  #allocation1 [shape = 'u32[144,128]{1,0:T(1,128)}', space=vmem, size = 0x12000, scoped, tag = 'internal scratch']
  %s0 = inlined_call_operand.vmem [shape: f32[2,3,16], index: 0, kind: input, shape index: {}]
  %s1 = inlined_call_operand.vmem [shape: f32[64,3], index: 1, kind: input, shape index: {}]
  %s2 = inlined_call_operand.vmem [shape: f32[64,1], index: 2, kind: input, shape index: {}]
  %s3 = inlined_call_operand.vmem [shape: f32[128,64], index: 3, kind: input, shape index: {}]
  %s4 = inlined_call_operand.vmem [shape: f32[128,1], index: 4, kind: input, shape index: {}]
  %s5 = inlined_call_operand.vmem [shape: f32[512,128], index: 5, kind: input, shape index: {}]
  %s6 = inlined_call_operand.vmem [shape: f32[512,1], index: 6, kind: input, shape index: {}]
  %s7 = inlined_call_operand.vmem [shape: f32[2,1,512,2], index: 7, kind: output, shape index: {}]
  %s8 = sld [smem:[#allocation0]]
  $region65: #{tpu_custom_call.1} parent=0
    _
  %s10 = ssub.s32 1, %s8
  %s11 = scalar_select 0, %s10, %s8
  loop: start=0, step=1, limit=4
  $region2: #{tpu_custom_call.1} parent=0 // loop_pre_header
    _
  $region3: #{tpu_custom_call.1} parent=0 // loop_header
    %s13 = sphi 0, %s17
    %p14 = scmp.ge.s32.totalorder %s13, 4
    %s20 = sphi 0, %s39
    %s21 = sphi 0, %s35
    %s22 = sphi 0, %s31
    %s23 = sphi 0, %s20
    %s24 = sphi 0, %s21
    %s25 = sphi 0, %s22
    %s26 = sphi 0, %s23
    %s27 = sphi 0, %s24
    %s28 = sphi 0, %s25
    %s50 = sphi 0, %s52
    %s53 = sphi 0, %s50
    %s54 = sphi 0, %s53
    %s70 = sphi 0, %s54
    %s74 = sphi 0, %s74
    %s76 = sphi 0, %s74
    %s77 = sphi 0, %s76
    %s91 = sphi 0, %s77
    %s95 = sphi 0, %s95
    %s97 = sphi 0, %s95
    %s98 = sphi 0, %s97
    %s112 = sphi 0, %s98
    %s116 = sphi 0, %s116
    %s118 = sphi 0, %s116
    %s119 = sphi 0, %s118
    %s133 = sphi 0, %s119
    %s137 = sphi 0, %s137
    %s139 = sphi 0, %s137
    %s140 = sphi 0, %s139
    %s154 = sphi 0, %s140
    %s158 = sphi 0, %s158
    %s160 = sphi 0, %s158
    %s161 = sphi 0, %s160
    %s175 = sphi 0, %s161
    %s179 = sphi 0, %s179
    %s181 = sphi 0, %s179
    %s182 = sphi 0, %s181
    %s196 = sphi 0, %s182
    %s204 = sphi 0, %s206
    %s207 = sphi 0, %s204
    %s208 = sphi 0, %s207
    %s224 = sphi 0, %s208
  $region4: #{tpu_custom_call.1} parent=0 // loop_header_branch
    %16 = sbr.rel (%p14) target = $region8
  $region5: #{tpu_custom_call.1} parent=0 // loop_body
    %s18 = ssub.s32 %s13, 1
    %s19 = ssub.s32 %s13, 2
    %s29 = sadd.s32 1, %s22
    %p30 = scmp.ge.s32.totalorder %s29, 1
    %s31 = scalar_select %p30, 0, %s29
    %s32 = sadd.s32 1, %s21
    %s33 = scalar_select %p30, %s32, %s21
    %p34 = scmp.ge.s32.totalorder %s33, 1
    %s35 = scalar_select %p34, 0, %s33
    %s36 = sadd.s32 1, %s20
    %s37 = scalar_select %p34, %s36, %s20
    %p38 = scmp.ge.s32.totalorder %s37, 2
    %s39 = scalar_select %p38, 0, %s37
    %s40 = sadd.s32 %s21, %s22
    %p41 = scmp.lt.s32.totalorder %s40, 0
    %s42 = scalar_select %p41, %s40, 0
    %s43 = sadd.s32 %s35, %s31
    %p44 = scmp.lt.s32.totalorder %s43, 0
    %s45 = scalar_select %p44, %s43, 0
    %s46 = ssub.s32 %s20, %s39
    %s47 = ssub.s32 %s42, %s45
    %s48 = sor.u32 %s46, %s47
    %p49 = scmp.eq.s32.totalorder %s48, 0
    %s51 = sadd.s32 %s50, 1
    %s52 = scalar_select %p49, %s50, %s51
    %p55 = pneg %p49
    %p56 = scmp.eq.s32.totalorder %s13, 1
    %p57 = por %p55, %p56
    %p58 = scmp.ne.s32.totalorder %s50, %s53
    %p59 = scmp.eq.s32.totalorder %s13, 0
    %p60 = por %p58, %p59
    %p61 = scmp.ne.s32.totalorder %s50, %s53
    %p62 = scmp.eq.s32.totalorder %s18, 1
    %p63 = por %p61, %p62
    %p64 = scmp.ne.s32.totalorder %s53, %s54
    %p65 = scmp.eq.s32.totalorder %s18, 0
    %p66 = por %p64, %p65
    %p67 = scmp.ne.s32.totalorder %s53, %s54
    %p68 = scmp.eq.s32.totalorder %s19, 1
    %p69 = por %p67, %p68
    %p71 = scmp.ne.s32.totalorder %s54, %s70
    %p72 = scmp.eq.s32.totalorder %s19, 0
    %p73 = por %p71, %p72
    %s75 = sadd.s32 %s74, 1
    %p78 = scmp.eq.s32.totalorder %s13, 1
    %p79 = scmp.ne.s32.totalorder %s74, %s76
    %p80 = scmp.eq.s32.totalorder %s13, 0
    %p81 = por %p79, %p80
    %p82 = scmp.ne.s32.totalorder %s74, %s76
    %p83 = scmp.eq.s32.totalorder %s18, 1
    %p84 = por %p82, %p83
    %p85 = scmp.ne.s32.totalorder %s76, %s77
    %p86 = scmp.eq.s32.totalorder %s18, 0
    %p87 = por %p85, %p86
    %p88 = scmp.ne.s32.totalorder %s76, %s77
    %p89 = scmp.eq.s32.totalorder %s19, 1
    %p90 = por %p88, %p89
    %p92 = scmp.ne.s32.totalorder %s77, %s91
    %p93 = scmp.eq.s32.totalorder %s19, 0
    %p94 = por %p92, %p93
    %s96 = sadd.s32 %s95, 1
    %p99 = scmp.eq.s32.totalorder %s13, 1
    %p100 = scmp.ne.s32.totalorder %s95, %s97
    %p101 = scmp.eq.s32.totalorder %s13, 0
    %p102 = por %p100, %p101
    %p103 = scmp.ne.s32.totalorder %s95, %s97
    %p104 = scmp.eq.s32.totalorder %s18, 1
    %p105 = por %p103, %p104
    %p106 = scmp.ne.s32.totalorder %s97, %s98
    %p107 = scmp.eq.s32.totalorder %s18, 0
    %p108 = por %p106, %p107
    %p109 = scmp.ne.s32.totalorder %s97, %s98
    %p110 = scmp.eq.s32.totalorder %s19, 1
    %p111 = por %p109, %p110
    %p113 = scmp.ne.s32.totalorder %s98, %s112
    %p114 = scmp.eq.s32.totalorder %s19, 0
    %p115 = por %p113, %p114
    %s117 = sadd.s32 %s116, 1
    %p120 = scmp.eq.s32.totalorder %s13, 1
    %p121 = scmp.ne.s32.totalorder %s116, %s118
    %p122 = scmp.eq.s32.totalorder %s13, 0
    %p123 = por %p121, %p122
    %p124 = scmp.ne.s32.totalorder %s116, %s118
    %p125 = scmp.eq.s32.totalorder %s18, 1
    %p126 = por %p124, %p125
    %p127 = scmp.ne.s32.totalorder %s118, %s119
    %p128 = scmp.eq.s32.totalorder %s18, 0
    %p129 = por %p127, %p128
    %p130 = scmp.ne.s32.totalorder %s118, %s119
    %p131 = scmp.eq.s32.totalorder %s19, 1
    %p132 = por %p130, %p131
    %p134 = scmp.ne.s32.totalorder %s119, %s133
    %p135 = scmp.eq.s32.totalorder %s19, 0
    %p136 = por %p134, %p135
    %s138 = sadd.s32 %s137, 1
    %p141 = scmp.eq.s32.totalorder %s13, 1
    %p142 = scmp.ne.s32.totalorder %s137, %s139
    %p143 = scmp.eq.s32.totalorder %s13, 0
    %p144 = por %p142, %p143
    %p145 = scmp.ne.s32.totalorder %s137, %s139
    %p146 = scmp.eq.s32.totalorder %s18, 1
    %p147 = por %p145, %p146
    %p148 = scmp.ne.s32.totalorder %s139, %s140
    %p149 = scmp.eq.s32.totalorder %s18, 0
    %p150 = por %p148, %p149
    %p151 = scmp.ne.s32.totalorder %s139, %s140
    %p152 = scmp.eq.s32.totalorder %s19, 1
    %p153 = por %p151, %p152
    %p155 = scmp.ne.s32.totalorder %s140, %s154
    %p156 = scmp.eq.s32.totalorder %s19, 0
    %p157 = por %p155, %p156
    %s159 = sadd.s32 %s158, 1
    %p162 = scmp.eq.s32.totalorder %s13, 1
    %p163 = scmp.ne.s32.totalorder %s158, %s160
    %p164 = scmp.eq.s32.totalorder %s13, 0
    %p165 = por %p163, %p164
    %p166 = scmp.ne.s32.totalorder %s158, %s160
    %p167 = scmp.eq.s32.totalorder %s18, 1
    %p168 = por %p166, %p167
    %p169 = scmp.ne.s32.totalorder %s160, %s161
    %p170 = scmp.eq.s32.totalorder %s18, 0
    %p171 = por %p169, %p170
    %p172 = scmp.ne.s32.totalorder %s160, %s161
    %p173 = scmp.eq.s32.totalorder %s19, 1
    %p174 = por %p172, %p173
    %p176 = scmp.ne.s32.totalorder %s161, %s175
    %p177 = scmp.eq.s32.totalorder %s19, 0
    %p178 = por %p176, %p177
    %s180 = sadd.s32 %s179, 1
    %p183 = scmp.eq.s32.totalorder %s13, 1
    %p184 = scmp.ne.s32.totalorder %s179, %s181
    %p185 = scmp.eq.s32.totalorder %s13, 0
    %p186 = por %p184, %p185
    %p187 = scmp.ne.s32.totalorder %s179, %s181
    %p188 = scmp.eq.s32.totalorder %s18, 1
    %p189 = por %p187, %p188
    %p190 = scmp.ne.s32.totalorder %s181, %s182
    %p191 = scmp.eq.s32.totalorder %s18, 0
    %p192 = por %p190, %p191
    %p193 = scmp.ne.s32.totalorder %s181, %s182
    %p194 = scmp.eq.s32.totalorder %s19, 1
    %p195 = por %p193, %p194
    %p197 = scmp.ne.s32.totalorder %s182, %s196
    %p198 = scmp.eq.s32.totalorder %s19, 0
    %p199 = por %p197, %p198
    %s200 = ssub.s32 %s20, %s39
    %s201 = ssub.s32 %s21, %s35
    %s202 = sor.u32 %s200, %s201
    %p203 = scmp.eq.s32.totalorder %s202, 0
    %s205 = sadd.s32 %s204, 1
    %s206 = scalar_select %p203, %s204, %s205
    %p209 = pneg %p203
    %p210 = scmp.eq.s32.totalorder %s13, 1
    %p211 = por %p209, %p210
    %p212 = scmp.ne.s32.totalorder %s204, %s207
    %p213 = scmp.eq.s32.totalorder %s13, 0
    %p214 = por %p212, %p213
    %p215 = scmp.ne.s32.totalorder %s204, %s207
    %p216 = scmp.eq.s32.totalorder %s18, 1
    %p217 = por %p215, %p216
    %p218 = scmp.ne.s32.totalorder %s207, %s208
    %p219 = scmp.eq.s32.totalorder %s18, 0
    %p220 = por %p218, %p219
    %p221 = scmp.ne.s32.totalorder %s207, %s208
    %p222 = scmp.eq.s32.totalorder %s19, 1
    %p223 = por %p221, %p222
    %p225 = scmp.ne.s32.totalorder %s208, %s224
    %p226 = scmp.eq.s32.totalorder %s19, 0
    %p227 = por %p225, %p226
    %p228 = scmp.le.s32.totalorder 1, %s13
    %p229 = scmp.lt.s32.totalorder %s13, 3
    %p230 = pnand %p228, %p229
    %p231 = pneg %p230
    // Predicated region
    $region9: #{tpu_custom_call.1} parent=5 // pred_check
      _
    $region10: #{tpu_custom_call.1} parent=5 // pred_check_branch
      %233 = sbr.rel (%p230) target = $region12
    $region11: #{tpu_custom_call.1} parent=5 // pred_region
      %s234 = ssub.s32 %s13, 1
      // Predicated region
      $region13: #{tpu_custom_call.1} parent=11 // pred_check
        %p235 = pneg %p87
      $region14: #{tpu_custom_call.1} parent=11 // pred_check_branch
        %237 = sbr.rel (%p235) target = $region16
      $region15: #{tpu_custom_call.1} parent=11 // pred_region
        _
      $region16: #{tpu_custom_call.1} parent=11 // pred_fallthru
        _
      // Predicated region
      $region17: #{tpu_custom_call.1} parent=11 // pred_check
        %p238 = pneg %p108
      $region18: #{tpu_custom_call.1} parent=11 // pred_check_branch
        %240 = sbr.rel (%p238) target = $region20
      $region19: #{tpu_custom_call.1} parent=11 // pred_region
        _
      $region20: #{tpu_custom_call.1} parent=11 // pred_fallthru
        _
      // Predicated region
      $region21: #{tpu_custom_call.1} parent=11 // pred_check
        %p241 = pneg %p129
      $region22: #{tpu_custom_call.1} parent=11 // pred_check_branch
        %243 = sbr.rel (%p241) target = $region24
      $region23: #{tpu_custom_call.1} parent=11 // pred_region
        _
      $region24: #{tpu_custom_call.1} parent=11 // pred_fallthru
        _
      // Predicated region
      $region25: #{tpu_custom_call.1} parent=11 // pred_check
        %p244 = pneg %p150
      $region26: #{tpu_custom_call.1} parent=11 // pred_check_branch
        %246 = sbr.rel (%p244) target = $region28
      $region27: #{tpu_custom_call.1} parent=11 // pred_region
        _
      $region28: #{tpu_custom_call.1} parent=11 // pred_fallthru
        _
      // Predicated region
      $region29: #{tpu_custom_call.1} parent=11 // pred_check
        %p247 = pneg %p171
      $region30: #{tpu_custom_call.1} parent=11 // pred_check_branch
        %249 = sbr.rel (%p247) target = $region32
      $region31: #{tpu_custom_call.1} parent=11 // pred_region
        _
      $region32: #{tpu_custom_call.1} parent=11 // pred_fallthru
        _
      // Predicated region
      $region33: #{tpu_custom_call.1} parent=11 // pred_check
        %p250 = pneg %p192
      $region34: #{tpu_custom_call.1} parent=11 // pred_check_branch
        %252 = sbr.rel (%p250) target = $region36
      $region35: #{tpu_custom_call.1} parent=11 // pred_region
        _
      $region36: #{tpu_custom_call.1} parent=11 // pred_fallthru
        _
    $region12: #{tpu_custom_call.1} parent=5 // pred_fallthru
      _
    %p253 = scmp.lt.s32.totalorder %s13, 2
    // Predicated region
    $region37: #{tpu_custom_call.1} parent=5 // pred_check
      %p254 = pneg %p253
    $region38: #{tpu_custom_call.1} parent=5 // pred_check_branch
      %256 = sbr.rel (%p254) target = $region40
    $region39: #{tpu_custom_call.1} parent=5 // pred_region
      // Predicated region
      $region41: #{tpu_custom_call.1} parent=39 // pred_check
        %p257 = pneg %p60
      $region42: #{tpu_custom_call.1} parent=39 // pred_check_branch
        %259 = sbr.rel (%p257) target = $region44
      $region43: #{tpu_custom_call.1} parent=39 // pred_region
        %s260 = sadd.s32 %s21, %s22
        %p261 = scmp.lt.s32.totalorder %s260, 0
        %s262 = scalar_select %p261, %s260, 0
        %p263 = scmp.lt.s32.totalorder %s20, 1
        %s264 = scalar_select %p263, %s20, 1
        %p265 = scmp.lt.s32.totalorder %s262, 0
        %s266 = scalar_select %p265, %s262, 0
        %s267 = sadd.s32 %s266, %s264
        %s268 = smul.addr %s267, 4
        %s269 = scalar_lea.vmem %s0, %s268
        %s270 = sadd.s32 %s21, %s22
        %p271 = scmp.lt.s32.totalorder %s270, 0
        %s272 = scalar_select %p271, %s270, 0
      $region44: #{tpu_custom_call.1} parent=39 // pred_fallthru
        _
    $region40: #{tpu_custom_call.1} parent=5 // pred_fallthru
      _
    %p273 = scmp.le.s32.totalorder 1, %s13
    %p274 = scmp.lt.s32.totalorder %s13, 3
    %p275 = pnand %p273, %p274
    %p276 = pneg %p275
    // Predicated region
    $region45: #{tpu_custom_call.1} parent=5 // pred_check
      _
    $region46: #{tpu_custom_call.1} parent=5 // pred_check_branch
      %278 = sbr.rel (%p275) target = $region48
    $region47: #{tpu_custom_call.1} parent=5 // pred_region
      %s279 = ssub.s32 %s13, 1
      %s280 = sadd.s32 %s24, %s25
      %p281 = scmp.lt.s32.totalorder %s280, 0
      %s282 = scalar_select %p281, %s280, 0
      %p283 = scmp.lt.s32.totalorder %s23, 1
      %s284 = scalar_select %p283, %s23, 1
      %p285 = scmp.lt.s32.totalorder %s282, 0
      %s286 = scalar_select %p285, %s282, 0
      %s287 = sadd.s32 %s286, %s284
      %s288 = smul.addr %s287, 4
      %s289 = scalar_lea.vmem %s0, %s288
      %p290 = pneg %p66
      %p291 = pneg %p63
      %p292 = pneg %p87
      %p293 = pneg %p84
      %p294 = pneg %p108
      %p295 = pneg %p105
      %p296 = pneg %p129
      %p297 = pneg %p126
      %p298 = pneg %p150
      %p299 = pneg %p147
      %p300 = pneg %p171
      %p301 = pneg %p168
      %p302 = pneg %p192
      %p303 = pneg %p189
      %p304 = pneg %p220
      %p305 = pneg %p217
      %p306 = scmp.lt.s32.totalorder %s23, 1
      %s307 = scalar_select %p306, %s23, 1
      %p308 = scmp.lt.s32.totalorder %s24, 0
      %s309 = scalar_select %p308, %s24, 0
      %s310 = smul.addr %s309, 64
      %s311 = smul.addr %s307, 64
      %s312 = sadd.s32 %s310, %s311
      %s313 = smul.addr %s312, 8
      %s314 = scalar_lea.vmem %s7, %s313
      %s315 = sadd.s32 %s24, %s25
      %p316 = scmp.lt.s32.totalorder %s315, 0
      %s317 = scalar_select %p316, %s315, 0
      %p318 = scmp.lt.s32.totalorder %s23, 1
      %s319 = scalar_select %p318, %s23, 1
      %p320 = scmp.lt.s32.totalorder %s317, 0
      %s321 = scalar_select %p320, %s317, 0
      %s322 = sadd.s32 %s321, %s319
      %s323 = smul.addr %s322, 4
      %s324 = scalar_lea.vmem %s0, %s323
      %s325 = sadd.s32 %s24, %s25
      %p326 = scmp.lt.s32.totalorder %s325, 0
      %s327 = scalar_select %p326, %s325, 0
      %p328 = scmp.lt.s32.totalorder %s23, 1
      %s329 = scalar_select %p328, %s23, 1
      %p330 = scmp.lt.s32.totalorder %s24, 0
      %s331 = scalar_select %p330, %s24, 0
      %s332 = smul.addr %s331, 64
      %s333 = smul.addr %s329, 64
      %s334 = sadd.s32 %s332, %s333
      %s335 = smul.addr %s334, 8
      %s336 = scalar_lea.vmem %s7, %s335
      %v337 = vlaneseq
      %v338 = vand.u32 %v337, 127
      %p339 = scmp.eq.s32.totalorder %s25, 0
      // Predicated region
      $region49: #{tpu_custom_call.1} parent=47 // pred_check
        %p340 = pneg %p339
      $region50: #{tpu_custom_call.1} parent=47 // pred_check_branch
        %342 = sbr.rel (%p340) target = $region52
      $region51: #{tpu_custom_call.1} parent=47 // pred_region
        %vm343 = vcmp.eq.s32.totalorder %v338, 0
        %v344 = vsel %vm343, -inf, inf
        %vm345 = vcmask 15360
        %346 = vst.msk [vmem:[%s336] sm:$0xff] %vm345, %v344
        %347 = vst.msk [vmem:[%s336 + $0x8] sm:$0xff] %vm345, %v344
        %348 = vst.msk [vmem:[%s336 + $0x10] sm:$0xff] %vm345, %v344
        %349 = vst.msk [vmem:[%s336 + $0x18] sm:$0xff] %vm345, %v344
        %350 = vst.msk [vmem:[%s336 + $0x20] sm:$0xff] %vm345, %v344
        %351 = vst.msk [vmem:[%s336 + $0x28] sm:$0xff] %vm345, %v344
        %352 = vst.msk [vmem:[%s336 + $0x30] sm:$0xff] %vm345, %v344
        %353 = vst.msk [vmem:[%s336 + $0x38] sm:$0xff] %vm345, %v344
        %354 = vst.msk [vmem:[%s336 + $0x40] sm:$0xff] %vm345, %v344
        %355 = vst.msk [vmem:[%s336 + $0x48] sm:$0xff] %vm345, %v344
        %356 = vst.msk [vmem:[%s336 + $0x50] sm:$0xff] %vm345, %v344
        %357 = vst.msk [vmem:[%s336 + $0x58] sm:$0xff] %vm345, %v344
        %358 = vst.msk [vmem:[%s336 + $0x60] sm:$0xff] %vm345, %v344
        %359 = vst.msk [vmem:[%s336 + $0x68] sm:$0xff] %vm345, %v344
        %360 = vst.msk [vmem:[%s336 + $0x70] sm:$0xff] %vm345, %v344
        %361 = vst.msk [vmem:[%s336 + $0x78] sm:$0xff] %vm345, %v344
        %362 = vst.msk [vmem:[%s336 + $0x80] sm:$0xff] %vm345, %v344
        %363 = vst.msk [vmem:[%s336 + $0x88] sm:$0xff] %vm345, %v344
        %364 = vst.msk [vmem:[%s336 + $0x90] sm:$0xff] %vm345, %v344
        %365 = vst.msk [vmem:[%s336 + $0x98] sm:$0xff] %vm345, %v344
        %366 = vst.msk [vmem:[%s336 + $0xa0] sm:$0xff] %vm345, %v344
        %367 = vst.msk [vmem:[%s336 + $0xa8] sm:$0xff] %vm345, %v344
        %368 = vst.msk [vmem:[%s336 + $0xb0] sm:$0xff] %vm345, %v344
        %369 = vst.msk [vmem:[%s336 + $0xb8] sm:$0xff] %vm345, %v344
        %370 = vst.msk [vmem:[%s336 + $0xc0] sm:$0xff] %vm345, %v344
        %371 = vst.msk [vmem:[%s336 + $0xc8] sm:$0xff] %vm345, %v344
        %372 = vst.msk [vmem:[%s336 + $0xd0] sm:$0xff] %vm345, %v344
        %373 = vst.msk [vmem:[%s336 + $0xd8] sm:$0xff] %vm345, %v344
        %374 = vst.msk [vmem:[%s336 + $0xe0] sm:$0xff] %vm345, %v344
        %375 = vst.msk [vmem:[%s336 + $0xe8] sm:$0xff] %vm345, %v344
        %376 = vst.msk [vmem:[%s336 + $0xf0] sm:$0xff] %vm345, %v344
        %377 = vst.msk [vmem:[%s336 + $0xf8] sm:$0xff] %vm345, %v344
        %378 = vst.msk [vmem:[%s336 + $0x100] sm:$0xff] %vm345, %v344
        %379 = vst.msk [vmem:[%s336 + $0x108] sm:$0xff] %vm345, %v344
        %380 = vst.msk [vmem:[%s336 + $0x110] sm:$0xff] %vm345, %v344
        %381 = vst.msk [vmem:[%s336 + $0x118] sm:$0xff] %vm345, %v344
        %382 = vst.msk [vmem:[%s336 + $0x120] sm:$0xff] %vm345, %v344
        %383 = vst.msk [vmem:[%s336 + $0x128] sm:$0xff] %vm345, %v344
        %384 = vst.msk [vmem:[%s336 + $0x130] sm:$0xff] %vm345, %v344
        %385 = vst.msk [vmem:[%s336 + $0x138] sm:$0xff] %vm345, %v344
        %386 = vst.msk [vmem:[%s336 + $0x140] sm:$0xff] %vm345, %v344
        %387 = vst.msk [vmem:[%s336 + $0x148] sm:$0xff] %vm345, %v344
        %388 = vst.msk [vmem:[%s336 + $0x150] sm:$0xff] %vm345, %v344
        %389 = vst.msk [vmem:[%s336 + $0x158] sm:$0xff] %vm345, %v344
        %390 = vst.msk [vmem:[%s336 + $0x160] sm:$0xff] %vm345, %v344
        %391 = vst.msk [vmem:[%s336 + $0x168] sm:$0xff] %vm345, %v344
        %392 = vst.msk [vmem:[%s336 + $0x170] sm:$0xff] %vm345, %v344
        %393 = vst.msk [vmem:[%s336 + $0x178] sm:$0xff] %vm345, %v344
        %394 = vst.msk [vmem:[%s336 + $0x180] sm:$0xff] %vm345, %v344
        %395 = vst.msk [vmem:[%s336 + $0x188] sm:$0xff] %vm345, %v344
        %396 = vst.msk [vmem:[%s336 + $0x190] sm:$0xff] %vm345, %v344
        %397 = vst.msk [vmem:[%s336 + $0x198] sm:$0xff] %vm345, %v344
        %398 = vst.msk [vmem:[%s336 + $0x1a0] sm:$0xff] %vm345, %v344
        %399 = vst.msk [vmem:[%s336 + $0x1a8] sm:$0xff] %vm345, %v344
        %400 = vst.msk [vmem:[%s336 + $0x1b0] sm:$0xff] %vm345, %v344
        %401 = vst.msk [vmem:[%s336 + $0x1b8] sm:$0xff] %vm345, %v344
        %402 = vst.msk [vmem:[%s336 + $0x1c0] sm:$0xff] %vm345, %v344
        %403 = vst.msk [vmem:[%s336 + $0x1c8] sm:$0xff] %vm345, %v344
        %404 = vst.msk [vmem:[%s336 + $0x1d0] sm:$0xff] %vm345, %v344
        %405 = vst.msk [vmem:[%s336 + $0x1d8] sm:$0xff] %vm345, %v344
        %406 = vst.msk [vmem:[%s336 + $0x1e0] sm:$0xff] %vm345, %v344
        %407 = vst.msk [vmem:[%s336 + $0x1e8] sm:$0xff] %vm345, %v344
        %408 = vst.msk [vmem:[%s336 + $0x1f0] sm:$0xff] %vm345, %v344
        %409 = vst.msk [vmem:[%s336 + $0x1f8] sm:$0xff] %vm345, %v344
      $region52: #{tpu_custom_call.1} parent=47 // pred_fallthru
        _
      %v410 = vld [vmem:[%s324] sm:$0x7]
      %v411 = vld [vmem:[%s2] sm:$0xff]
      %v412 = vld [vmem:[%s2 + $0x8] sm:$0xff]
      %v413 = vld [vmem:[%s2 + $0x10] sm:$0xff]
      %v414 = vld [vmem:[%s2 + $0x18] sm:$0xff]
      %v415 = vld [vmem:[%s2 + $0x20] sm:$0xff]
      %v416 = vld [vmem:[%s2 + $0x28] sm:$0xff]
      %v417 = vld [vmem:[%s2 + $0x30] sm:$0xff]
      %v418 = vld [vmem:[%s2 + $0x38] sm:$0xff]
      %v419 = vld [vmem:[%s1] sm:$0xff]
      %v420 = vld [vmem:[%s1 + $0x8] sm:$0xff]
      %v421 = vld [vmem:[%s1 + $0x10] sm:$0xff]
      %v422 = vld [vmem:[%s1 + $0x18] sm:$0xff]
      %v423 = vld [vmem:[%s1 + $0x20] sm:$0xff]
      %v424 = vld [vmem:[%s1 + $0x28] sm:$0xff]
      %v425 = vld [vmem:[%s1 + $0x30] sm:$0xff]
      %v426 = vld [vmem:[%s1 + $0x38] sm:$0xff]
      %428 = vset.pattern.permute.xlu0 0
      %429 = vperm.xlu0 %428, %v419
      %v430 = vpop.permute.xlu0 %429
      %433 = vset.pattern.permute.xlu0 0
      %434 = vperm.xlu0 %433, %v420
      %v435 = vpop.permute.xlu0 %434
      %438 = vset.pattern.permute.xlu0 0
      %439 = vperm.xlu0 %438, %v421
      %v440 = vpop.permute.xlu0 %439
      %443 = vset.pattern.permute.xlu0 0
      %444 = vperm.xlu0 %443, %v422
      %v445 = vpop.permute.xlu0 %444
      %448 = vset.pattern.permute.xlu0 0
      %449 = vperm.xlu0 %448, %v423
      %v450 = vpop.permute.xlu0 %449
      %453 = vset.pattern.permute.xlu0 0
      %454 = vperm.xlu0 %453, %v424
      %v455 = vpop.permute.xlu0 %454
      %458 = vset.pattern.permute.xlu0 0
      %459 = vperm.xlu0 %458, %v425
      %v460 = vpop.permute.xlu0 %459
      %463 = vset.pattern.permute.xlu0 0
      %464 = vperm.xlu0 %463, %v426
      %v465 = vpop.permute.xlu0 %464
      %v467 = vlaneseq
      %v468 = vshrl.u32 %v467, 7
      %v469 = vsub.s32 0, %v468
      %v470 = vrot.slane %v410, %v469
      %v471 = vmul.f32 %v430, %v470
      %v472 = vmul.f32 %v435, %v470
      %v473 = vmul.f32 %v440, %v470
      %v474 = vmul.f32 %v445, %v470
      %v475 = vmul.f32 %v450, %v470
      %v476 = vmul.f32 %v455, %v470
      %v477 = vmul.f32 %v460, %v470
      %v478 = vmul.f32 %v465, %v470
      %480 = vset.pattern.permute.xlu0 0
      %481 = vperm.xlu0 %480, %v411
      %v482 = vpop.permute.xlu0 %481
      %485 = vset.pattern.permute.xlu0 0
      %486 = vperm.xlu0 %485, %v412
      %v487 = vpop.permute.xlu0 %486
      %490 = vset.pattern.permute.xlu0 0
      %491 = vperm.xlu0 %490, %v413
      %v492 = vpop.permute.xlu0 %491
      %495 = vset.pattern.permute.xlu0 0
      %496 = vperm.xlu0 %495, %v414
      %v497 = vpop.permute.xlu0 %496
      %500 = vset.pattern.permute.xlu0 0
      %501 = vperm.xlu0 %500, %v415
      %v502 = vpop.permute.xlu0 %501
      %505 = vset.pattern.permute.xlu0 0
      %506 = vperm.xlu0 %505, %v416
      %v507 = vpop.permute.xlu0 %506
      %510 = vset.pattern.permute.xlu0 0
      %511 = vperm.xlu0 %510, %v417
      %v512 = vpop.permute.xlu0 %511
      %515 = vset.pattern.permute.xlu0 0
      %516 = vperm.xlu0 %515, %v418
      %v517 = vpop.permute.xlu0 %516
      %v519 = vadd.f32 %v482, %v471
      %v520 = vadd.f32 %v487, %v472
      %v521 = vadd.f32 %v492, %v473
      %v522 = vadd.f32 %v497, %v474
      %v523 = vadd.f32 %v502, %v475
      %v524 = vadd.f32 %v507, %v476
      %v525 = vadd.f32 %v512, %v477
      %v526 = vadd.f32 %v517, %v478
      %527 = vset.pattern.permute.xlu0 1
      %528 = vperm.xlu0 %527, %v419
      %v529 = vpop.permute.xlu0 %528
      %531 = vset.pattern.permute.xlu0 1
      %532 = vperm.xlu0 %531, %v420
      %v533 = vpop.permute.xlu0 %532
      %535 = vset.pattern.permute.xlu0 1
      %536 = vperm.xlu0 %535, %v421
      %v537 = vpop.permute.xlu0 %536
      %539 = vset.pattern.permute.xlu0 1
      %540 = vperm.xlu0 %539, %v422
      %v541 = vpop.permute.xlu0 %540
      %543 = vset.pattern.permute.xlu0 1
      %544 = vperm.xlu0 %543, %v423
      %v545 = vpop.permute.xlu0 %544
      %547 = vset.pattern.permute.xlu0 1
      %548 = vperm.xlu0 %547, %v424
      %v549 = vpop.permute.xlu0 %548
      %551 = vset.pattern.permute.xlu0 1
      %552 = vperm.xlu0 %551, %v425
      %v553 = vpop.permute.xlu0 %552
      %555 = vset.pattern.permute.xlu0 1
      %556 = vperm.xlu0 %555, %v426
      %v557 = vpop.permute.xlu0 %556
      %v559 = vlaneseq
      %v560 = vshrl.u32 %v559, 7
      %v561 = vsub.s32 1, %v560
      %v562 = vrot.slane %v410, %v561
      %v563 = vmul.f32 %v529, %v562
      %v564 = vmul.f32 %v533, %v562
      %v565 = vmul.f32 %v537, %v562
      %v566 = vmul.f32 %v541, %v562
      %v567 = vmul.f32 %v545, %v562
      %v568 = vmul.f32 %v549, %v562
      %v569 = vmul.f32 %v553, %v562
      %v570 = vmul.f32 %v557, %v562
      %v571 = vadd.f32 %v519, %v563
      %v572 = vadd.f32 %v520, %v564
      %v573 = vadd.f32 %v521, %v565
      %v574 = vadd.f32 %v522, %v566
      %v575 = vadd.f32 %v523, %v567
      %v576 = vadd.f32 %v524, %v568
      %v577 = vadd.f32 %v525, %v569
      %v578 = vadd.f32 %v526, %v570
      %579 = vset.pattern.permute.xlu0 2
      %580 = vperm.xlu0 %579, %v419
      %v581 = vpop.permute.xlu0 %580
      %583 = vset.pattern.permute.xlu0 2
      %584 = vperm.xlu0 %583, %v420
      %v585 = vpop.permute.xlu0 %584
      %587 = vset.pattern.permute.xlu0 2
      %588 = vperm.xlu0 %587, %v421
      %v589 = vpop.permute.xlu0 %588
      %591 = vset.pattern.permute.xlu0 2
      %592 = vperm.xlu0 %591, %v422
      %v593 = vpop.permute.xlu0 %592
      %595 = vset.pattern.permute.xlu0 2
      %596 = vperm.xlu0 %595, %v423
      %v597 = vpop.permute.xlu0 %596
      %599 = vset.pattern.permute.xlu0 2
      %600 = vperm.xlu0 %599, %v424
      %v601 = vpop.permute.xlu0 %600
      %603 = vset.pattern.permute.xlu0 2
      %604 = vperm.xlu0 %603, %v425
      %v605 = vpop.permute.xlu0 %604
      %607 = vset.pattern.permute.xlu0 2
      %608 = vperm.xlu0 %607, %v426
      %v609 = vpop.permute.xlu0 %608
      %v611 = vlaneseq
      %v612 = vshrl.u32 %v611, 7
      %v613 = vsub.s32 2, %v612
      %v614 = vrot.slane %v410, %v613
      %v615 = vmul.f32 %v581, %v614
      %v616 = vmul.f32 %v585, %v614
      %v617 = vmul.f32 %v589, %v614
      %v618 = vmul.f32 %v593, %v614
      %v619 = vmul.f32 %v597, %v614
      %v620 = vmul.f32 %v601, %v614
      %v621 = vmul.f32 %v605, %v614
      %v622 = vmul.f32 %v609, %v614
      %v623 = vadd.f32 %v571, %v615
      %v624 = vadd.f32 %v572, %v616
      %v625 = vadd.f32 %v573, %v617
      %v626 = vadd.f32 %v574, %v618
      %v627 = vadd.f32 %v575, %v619
      %v628 = vadd.f32 %v576, %v620
      %v629 = vadd.f32 %v577, %v621
      %v630 = vadd.f32 %v578, %v622
      %v631 = vmax.f32 %v623, 0.0
      %v632 = vmax.f32 %v624, 0.0
      %v633 = vmax.f32 %v625, 0.0
      %v634 = vmax.f32 %v626, 0.0
      %v635 = vmax.f32 %v627, 0.0
      %v636 = vmax.f32 %v628, 0.0
      %v637 = vmax.f32 %v629, 0.0
      %v638 = vmax.f32 %v630, 0.0
      %v639 = vld [vmem:[%s3] sm:$0xff]
      %v640 = vld [vmem:[%s3 + $0x8] sm:$0xff]
      %v641 = vld [vmem:[%s3 + $0x10] sm:$0xff]
      %v642 = vld [vmem:[%s3 + $0x18] sm:$0xff]
      %v643 = vld [vmem:[%s3 + $0x20] sm:$0xff]
      %v644 = vld [vmem:[%s3 + $0x28] sm:$0xff]
      %v645 = vld [vmem:[%s3 + $0x30] sm:$0xff]
      %v646 = vld [vmem:[%s3 + $0x38] sm:$0xff]
      %v647 = vld [vmem:[%s3 + $0x40] sm:$0xff]
      %v648 = vld [vmem:[%s3 + $0x48] sm:$0xff]
      %v649 = vld [vmem:[%s3 + $0x50] sm:$0xff]
      %v650 = vld [vmem:[%s3 + $0x58] sm:$0xff]
      %v651 = vld [vmem:[%s3 + $0x60] sm:$0xff]
      %v652 = vld [vmem:[%s3 + $0x68] sm:$0xff]
      %v653 = vld [vmem:[%s3 + $0x70] sm:$0xff]
      %v654 = vld [vmem:[%s3 + $0x78] sm:$0xff]
      %v655 = vld [vmem:[%s4] sm:$0xff]
      %v656 = vld [vmem:[%s4 + $0x8] sm:$0xff]
      %v657 = vld [vmem:[%s4 + $0x10] sm:$0xff]
      %v658 = vld [vmem:[%s4 + $0x18] sm:$0xff]
      %v659 = vld [vmem:[%s4 + $0x20] sm:$0xff]
      %v660 = vld [vmem:[%s4 + $0x28] sm:$0xff]
      %v661 = vld [vmem:[%s4 + $0x30] sm:$0xff]
      %v662 = vld [vmem:[%s4 + $0x38] sm:$0xff]
      %v663 = vld [vmem:[%s4 + $0x40] sm:$0xff]
      %v664 = vld [vmem:[%s4 + $0x48] sm:$0xff]
      %v665 = vld [vmem:[%s4 + $0x50] sm:$0xff]
      %v666 = vld [vmem:[%s4 + $0x58] sm:$0xff]
      %v667 = vld [vmem:[%s4 + $0x60] sm:$0xff]
      %v668 = vld [vmem:[%s4 + $0x68] sm:$0xff]
      %v669 = vld [vmem:[%s4 + $0x70] sm:$0xff]
      %v670 = vld [vmem:[%s4 + $0x78] sm:$0xff]
      %672 = vset.pattern.permute.xlu0 0
      %673 = vperm.xlu0 %672, %v655
      %v674 = vpop.permute.xlu0 %673
      %677 = vset.pattern.permute.xlu0 0
      %678 = vperm.xlu0 %677, %v656
      %v679 = vpop.permute.xlu0 %678
      %682 = vset.pattern.permute.xlu0 0
      %683 = vperm.xlu0 %682, %v657
      %v684 = vpop.permute.xlu0 %683
      %687 = vset.pattern.permute.xlu0 0
      %688 = vperm.xlu0 %687, %v658
      %v689 = vpop.permute.xlu0 %688
      %692 = vset.pattern.permute.xlu0 0
      %693 = vperm.xlu0 %692, %v659
      %v694 = vpop.permute.xlu0 %693
      %697 = vset.pattern.permute.xlu0 0
      %698 = vperm.xlu0 %697, %v660
      %v699 = vpop.permute.xlu0 %698
      %702 = vset.pattern.permute.xlu0 0
      %703 = vperm.xlu0 %702, %v661
      %v704 = vpop.permute.xlu0 %703
      %707 = vset.pattern.permute.xlu0 0
      %708 = vperm.xlu0 %707, %v662
      %v709 = vpop.permute.xlu0 %708
      %712 = vset.pattern.permute.xlu0 0
      %713 = vperm.xlu0 %712, %v663
      %v714 = vpop.permute.xlu0 %713
      %717 = vset.pattern.permute.xlu0 0
      %718 = vperm.xlu0 %717, %v664
      %v719 = vpop.permute.xlu0 %718
      %722 = vset.pattern.permute.xlu0 0
      %723 = vperm.xlu0 %722, %v665
      %v724 = vpop.permute.xlu0 %723
      %727 = vset.pattern.permute.xlu0 0
      %728 = vperm.xlu0 %727, %v666
      %v729 = vpop.permute.xlu0 %728
      %732 = vset.pattern.permute.xlu0 0
      %733 = vperm.xlu0 %732, %v667
      %v734 = vpop.permute.xlu0 %733
      %737 = vset.pattern.permute.xlu0 0
      %738 = vperm.xlu0 %737, %v668
      %v739 = vpop.permute.xlu0 %738
      %742 = vset.pattern.permute.xlu0 0
      %743 = vperm.xlu0 %742, %v669
      %v744 = vpop.permute.xlu0 %743
      %747 = vset.pattern.permute.xlu0 0
      %748 = vperm.xlu0 %747, %v670
      %v749 = vpop.permute.xlu0 %748
      %vm751 = vcmask 523264
      %v753 = vsel %vm751, %v639, 0
      %v756 = vsel %vm751, %v640, 0
      %v759 = vsel %vm751, %v641, 0
      %v762 = vsel %vm751, %v642, 0
      %v765 = vsel %vm751, %v643, 0
      %v768 = vsel %vm751, %v644, 0
      %v771 = vsel %vm751, %v645, 0
      %v774 = vsel %vm751, %v646, 0
      %v777 = vsel %vm751, %v647, 0
      %v780 = vsel %vm751, %v648, 0
      %v783 = vsel %vm751, %v649, 0
      %v786 = vsel %vm751, %v650, 0
      %v789 = vsel %vm751, %v651, 0
      %v792 = vsel %vm751, %v652, 0
      %v795 = vsel %vm751, %v653, 0
      %v798 = vsel %vm751, %v654, 0
      %800 = vmatprep.subr.mxu0 0.0
      %801 = vmatpush1.msra.mxu0 0.0
      %802 = vmatprep.subr.mxu0 0.0
      %803 = vmatpush1.msra.mxu0 0.0
      %804 = vmatprep.subr.mxu0 0.0
      %805 = vmatpush1.msra.mxu0 0.0
      %806 = vmatprep.subr.mxu0 0.0
      %807 = vmatpush1.msra.mxu0 0.0
      %808 = vmatprep.subr.mxu0 0.0
      %809 = vmatpush1.msra.mxu0 0.0
      %810 = vmatprep.subr.mxu0 0.0
      %811 = vmatpush1.msra.mxu0 0.0
      %812 = vmatprep.subr.mxu0 0.0
      %813 = vmatpush1.msra.mxu0 0.0
      %814 = vmatprep.subr.mxu0 0.0
      %815 = vmatpush1.msra.mxu0 0.0
      %816 = vmatprep.subr.mxu0 0.0
      %817 = vmatpush1.msra.mxu0 %v638
      %818 = vmatprep.subr.mxu0 0.0
      %819 = vmatpush1.msra.mxu0 %v637
      %820 = vmatprep.subr.mxu0 0.0
      %821 = vmatpush1.msra.mxu0 %v636
      %822 = vmatprep.subr.mxu0 0.0
      %823 = vmatpush1.msra.mxu0 %v635
      %824 = vmatprep.subr.mxu0 0.0
      %825 = vmatpush1.msra.mxu0 %v634
      %826 = vmatprep.subr.mxu0 0.0
      %827 = vmatpush1.msra.mxu0 %v633
      %828 = vmatprep.subr.mxu0 0.0
      %829 = vmatpush1.msra.mxu0 %v632
      %830 = vmatprep.subr.mxu0 0.0
      %831 = vmatpush1.msra.mxu0 %v631
      %832 = vmatprep.subr.mxu0 0.0
      %833 = vmatpush2.msra.mxu0 0.0
      %834 = vmatprep.subr.mxu0 0.0
      %835 = vmatpush2.msra.mxu0 0.0
      %836 = vmatprep.subr.mxu0 0.0
      %837 = vmatpush2.msra.mxu0 0.0
      %838 = vmatprep.subr.mxu0 0.0
      %839 = vmatpush2.msra.mxu0 0.0
      %840 = vmatprep.subr.mxu0 0.0
      %841 = vmatpush2.msra.mxu0 0.0
      %842 = vmatprep.subr.mxu0 0.0
      %843 = vmatpush2.msra.mxu0 0.0
      %844 = vmatprep.subr.mxu0 0.0
      %845 = vmatpush2.msra.mxu0 0.0
      %846 = vmatprep.subr.mxu0 0.0
      %847 = vmatpush2.msra.mxu0 0.0
      %848 = vmatprep.subr.mxu0 0.0
      %849 = vmatpush2.msra.mxu0 0.0
      %850 = vmatprep.subr.mxu0 0.0
      %851 = vmatpush2.msra.mxu0 0.0
      %852 = vmatprep.subr.mxu0 0.0
      %853 = vmatpush2.msra.mxu0 0.0
      %854 = vmatprep.subr.mxu0 0.0
      %855 = vmatpush2.msra.mxu0 0.0
      %856 = vmatprep.subr.mxu0 0.0
      %857 = vmatpush2.msra.mxu0 0.0
      %858 = vmatprep.subr.mxu0 0.0
      %859 = vmatpush2.msra.mxu0 0.0
      %860 = vmatprep.subr.mxu0 0.0
      %861 = vmatpush2.msra.mxu0 0.0
      %862 = vmatprep.subr.mxu0 0.0
      %863 = vmatpush2.msra.mxu0 0.0
      %864 = vmatprep.mubr.f32.mxu0 0.0
      %865 = vmatmul.mubr.f32.gmra.mxu0 %v753
      %v866 = vpop.f32.mrf.mxu0
      %v867 = vadd.f32 %v674, %v866
      %v868 = vpop.f32.mrf.mxu0
      %869 = vmatprep.mubr.f32.mxu0 0.0
      %870 = vmatmul.mubr.f32.gmra.mxu0 %v756
      %v871 = vpop.f32.mrf.mxu0
      %v872 = vadd.f32 %v679, %v871
      %v873 = vpop.f32.mrf.mxu0
      %874 = vmatprep.mubr.f32.mxu0 0.0
      %875 = vmatmul.mubr.f32.gmra.mxu0 %v759
      %v876 = vpop.f32.mrf.mxu0
      %v877 = vadd.f32 %v684, %v876
      %v878 = vpop.f32.mrf.mxu0
      %879 = vmatprep.mubr.f32.mxu0 0.0
      %880 = vmatmul.mubr.f32.gmra.mxu0 %v762
      %v881 = vpop.f32.mrf.mxu0
      %v882 = vadd.f32 %v689, %v881
      %v883 = vpop.f32.mrf.mxu0
      %884 = vmatprep.mubr.f32.mxu0 0.0
      %885 = vmatmul.mubr.f32.gmra.mxu0 %v765
      %v886 = vpop.f32.mrf.mxu0
      %v887 = vadd.f32 %v694, %v886
      %v888 = vpop.f32.mrf.mxu0
      %889 = vmatprep.mubr.f32.mxu0 0.0
      %890 = vmatmul.mubr.f32.gmra.mxu0 %v768
      %v891 = vpop.f32.mrf.mxu0
      %v892 = vadd.f32 %v699, %v891
      %v893 = vpop.f32.mrf.mxu0
      %894 = vmatprep.mubr.f32.mxu0 0.0
      %895 = vmatmul.mubr.f32.gmra.mxu0 %v771
      %v896 = vpop.f32.mrf.mxu0
      %v897 = vadd.f32 %v704, %v896
      %v898 = vpop.f32.mrf.mxu0
      %899 = vmatprep.mubr.f32.mxu0 0.0
      %900 = vmatmul.mubr.f32.gmra.mxu0 %v774
      %v901 = vpop.f32.mrf.mxu0
      %v902 = vadd.f32 %v709, %v901
      %v903 = vpop.f32.mrf.mxu0
      %904 = vmatprep.mubr.f32.mxu0 0.0
      %905 = vmatmul.mubr.f32.gmra.mxu0 %v777
      %v906 = vpop.f32.mrf.mxu0
      %v907 = vadd.f32 %v714, %v906
      %v908 = vpop.f32.mrf.mxu0
      %909 = vmatprep.mubr.f32.mxu0 0.0
      %910 = vmatmul.mubr.f32.gmra.mxu0 %v780
      %v911 = vpop.f32.mrf.mxu0
      %v912 = vadd.f32 %v719, %v911
      %v913 = vpop.f32.mrf.mxu0
      %914 = vmatprep.mubr.f32.mxu0 0.0
      %915 = vmatmul.mubr.f32.gmra.mxu0 %v783
      %v916 = vpop.f32.mrf.mxu0
      %v917 = vadd.f32 %v724, %v916
      %v918 = vpop.f32.mrf.mxu0
      %919 = vmatprep.mubr.f32.mxu0 0.0
      %920 = vmatmul.mubr.f32.gmra.mxu0 %v786
      %v921 = vpop.f32.mrf.mxu0
      %v922 = vadd.f32 %v729, %v921
      %v923 = vpop.f32.mrf.mxu0
      %924 = vmatprep.mubr.f32.mxu0 0.0
      %925 = vmatmul.mubr.f32.gmra.mxu0 %v789
      %v926 = vpop.f32.mrf.mxu0
      %v927 = vadd.f32 %v734, %v926
      %v928 = vpop.f32.mrf.mxu0
      %929 = vmatprep.mubr.f32.mxu0 0.0
      %930 = vmatmul.mubr.f32.gmra.mxu0 %v792
      %v931 = vpop.f32.mrf.mxu0
      %v932 = vadd.f32 %v739, %v931
      %v933 = vpop.f32.mrf.mxu0
      %934 = vmatprep.mubr.f32.mxu0 0.0
      %935 = vmatmul.mubr.f32.gmra.mxu0 %v795
      %v936 = vpop.f32.mrf.mxu0
      %v937 = vadd.f32 %v744, %v936
      %v938 = vpop.f32.mrf.mxu0
      %939 = vmatprep.mubr.f32.mxu0 0.0
      %940 = vmatmul.mubr.f32.gmra.mxu0 %v798
      %v941 = vpop.f32.mrf.mxu0
      %v942 = vadd.f32 %v749, %v941
      %v943 = vpop.f32.mrf.mxu0
      %944 = vdwg.mxu0
      %v945 = vmax.f32 %v867, 0.0
      %v946 = vmax.f32 %v872, 0.0
      %v947 = vmax.f32 %v877, 0.0
      %v948 = vmax.f32 %v882, 0.0
      %v949 = vmax.f32 %v887, 0.0
      %v950 = vmax.f32 %v892, 0.0
      %v951 = vmax.f32 %v897, 0.0
      %v952 = vmax.f32 %v902, 0.0
      %v953 = vmax.f32 %v907, 0.0
      %v954 = vmax.f32 %v912, 0.0
      %v955 = vmax.f32 %v917, 0.0
      %v956 = vmax.f32 %v922, 0.0
      %v957 = vmax.f32 %v927, 0.0
      %v958 = vmax.f32 %v932, 0.0
      %v959 = vmax.f32 %v937, 0.0
      %v960 = vmax.f32 %v942, 0.0
      %v961 = vld [vmem:[%s5] sm:$0xff]
      %v962 = vld [vmem:[%s5 + $0x8] sm:$0xff]
      %v963 = vld [vmem:[%s5 + $0x10] sm:$0xff]
      %v964 = vld [vmem:[%s5 + $0x18] sm:$0xff]
      %v965 = vld [vmem:[%s5 + $0x20] sm:$0xff]
      %v966 = vld [vmem:[%s5 + $0x28] sm:$0xff]
      %v967 = vld [vmem:[%s5 + $0x30] sm:$0xff]
      %v968 = vld [vmem:[%s5 + $0x38] sm:$0xff]
      %v969 = vld [vmem:[%s5 + $0x40] sm:$0xff]
      %v970 = vld [vmem:[%s5 + $0x48] sm:$0xff]
      %v971 = vld [vmem:[%s5 + $0x50] sm:$0xff]
      %v972 = vld [vmem:[%s5 + $0x58] sm:$0xff]
      %v973 = vld [vmem:[%s5 + $0x60] sm:$0xff]
      %v974 = vld [vmem:[%s5 + $0x68] sm:$0xff]
      %v975 = vld [vmem:[%s5 + $0x70] sm:$0xff]
      %v976 = vld [vmem:[%s5 + $0x78] sm:$0xff]
      %v977 = vld [vmem:[%s5 + $0x80] sm:$0xff]
      %v978 = vld [vmem:[%s5 + $0x88] sm:$0xff]
      %v979 = vld [vmem:[%s5 + $0x90] sm:$0xff]
      %v980 = vld [vmem:[%s5 + $0x98] sm:$0xff]
      %v981 = vld [vmem:[%s5 + $0xa0] sm:$0xff]
      %v982 = vld [vmem:[%s5 + $0xa8] sm:$0xff]
      %v983 = vld [vmem:[%s5 + $0xb0] sm:$0xff]
      %v984 = vld [vmem:[%s5 + $0xb8] sm:$0xff]
      %v985 = vld [vmem:[%s5 + $0xc0] sm:$0xff]
      %v986 = vld [vmem:[%s5 + $0xc8] sm:$0xff]
      %v987 = vld [vmem:[%s5 + $0xd0] sm:$0xff]
      %v988 = vld [vmem:[%s5 + $0xd8] sm:$0xff]
      %v989 = vld [vmem:[%s5 + $0xe0] sm:$0xff]
      %v990 = vld [vmem:[%s5 + $0xe8] sm:$0xff]
      %v991 = vld [vmem:[%s5 + $0xf0] sm:$0xff]
      %v992 = vld [vmem:[%s5 + $0xf8] sm:$0xff]
      %v993 = vld [vmem:[%s5 + $0x100] sm:$0xff]
      %v994 = vld [vmem:[%s5 + $0x108] sm:$0xff]
      %v995 = vld [vmem:[%s5 + $0x110] sm:$0xff]
      %v996 = vld [vmem:[%s5 + $0x118] sm:$0xff]
      %v997 = vld [vmem:[%s5 + $0x120] sm:$0xff]
      %v998 = vld [vmem:[%s5 + $0x128] sm:$0xff]
      %v999 = vld [vmem:[%s5 + $0x130] sm:$0xff]
      %v1000 = vld [vmem:[%s5 + $0x138] sm:$0xff]
      %v1001 = vld [vmem:[%s5 + $0x140] sm:$0xff]
      %v1002 = vld [vmem:[%s5 + $0x148] sm:$0xff]
      %v1003 = vld [vmem:[%s5 + $0x150] sm:$0xff]
      %v1004 = vld [vmem:[%s5 + $0x158] sm:$0xff]
      %v1005 = vld [vmem:[%s5 + $0x160] sm:$0xff]
      %v1006 = vld [vmem:[%s5 + $0x168] sm:$0xff]
      %v1007 = vld [vmem:[%s5 + $0x170] sm:$0xff]
      %v1008 = vld [vmem:[%s5 + $0x178] sm:$0xff]
      %v1009 = vld [vmem:[%s5 + $0x180] sm:$0xff]
      %v1010 = vld [vmem:[%s5 + $0x188] sm:$0xff]
      %v1011 = vld [vmem:[%s5 + $0x190] sm:$0xff]
      %v1012 = vld [vmem:[%s5 + $0x198] sm:$0xff]
      %v1013 = vld [vmem:[%s5 + $0x1a0] sm:$0xff]
      %v1014 = vld [vmem:[%s5 + $0x1a8] sm:$0xff]
      %v1015 = vld [vmem:[%s5 + $0x1b0] sm:$0xff]
      %v1016 = vld [vmem:[%s5 + $0x1b8] sm:$0xff]
      %v1017 = vld [vmem:[%s5 + $0x1c0] sm:$0xff]
      %v1018 = vld [vmem:[%s5 + $0x1c8] sm:$0xff]
      %v1019 = vld [vmem:[%s5 + $0x1d0] sm:$0xff]
      %v1020 = vld [vmem:[%s5 + $0x1d8] sm:$0xff]
      %v1021 = vld [vmem:[%s5 + $0x1e0] sm:$0xff]
      %v1022 = vld [vmem:[%s5 + $0x1e8] sm:$0xff]
      %v1023 = vld [vmem:[%s5 + $0x1f0] sm:$0xff]
      %v1024 = vld [vmem:[%s5 + $0x1f8] sm:$0xff]
      %v1025 = vld [vmem:[%s6] sm:$0xff]
      %v1026 = vld [vmem:[%s6 + $0x8] sm:$0xff]
      %v1027 = vld [vmem:[%s6 + $0x10] sm:$0xff]
      %v1028 = vld [vmem:[%s6 + $0x18] sm:$0xff]
      %v1029 = vld [vmem:[%s6 + $0x20] sm:$0xff]
      %v1030 = vld [vmem:[%s6 + $0x28] sm:$0xff]
      %v1031 = vld [vmem:[%s6 + $0x30] sm:$0xff]
      %v1032 = vld [vmem:[%s6 + $0x38] sm:$0xff]
      %v1033 = vld [vmem:[%s6 + $0x40] sm:$0xff]
      %v1034 = vld [vmem:[%s6 + $0x48] sm:$0xff]
      %v1035 = vld [vmem:[%s6 + $0x50] sm:$0xff]
      %v1036 = vld [vmem:[%s6 + $0x58] sm:$0xff]
      %v1037 = vld [vmem:[%s6 + $0x60] sm:$0xff]
      %v1038 = vld [vmem:[%s6 + $0x68] sm:$0xff]
      %v1039 = vld [vmem:[%s6 + $0x70] sm:$0xff]
      %v1040 = vld [vmem:[%s6 + $0x78] sm:$0xff]
      %v1041 = vld [vmem:[%s6 + $0x80] sm:$0xff]
      %v1042 = vld [vmem:[%s6 + $0x88] sm:$0xff]
      %v1043 = vld [vmem:[%s6 + $0x90] sm:$0xff]
      %v1044 = vld [vmem:[%s6 + $0x98] sm:$0xff]
      %v1045 = vld [vmem:[%s6 + $0xa0] sm:$0xff]
      %v1046 = vld [vmem:[%s6 + $0xa8] sm:$0xff]
      %v1047 = vld [vmem:[%s6 + $0xb0] sm:$0xff]
      %v1048 = vld [vmem:[%s6 + $0xb8] sm:$0xff]
      %v1049 = vld [vmem:[%s6 + $0xc0] sm:$0xff]
      %v1050 = vld [vmem:[%s6 + $0xc8] sm:$0xff]
      %v1051 = vld [vmem:[%s6 + $0xd0] sm:$0xff]
      %v1052 = vld [vmem:[%s6 + $0xd8] sm:$0xff]
      %v1053 = vld [vmem:[%s6 + $0xe0] sm:$0xff]
      %v1054 = vld [vmem:[%s6 + $0xe8] sm:$0xff]
      %v1055 = vld [vmem:[%s6 + $0xf0] sm:$0xff]
      %v1056 = vld [vmem:[%s6 + $0xf8] sm:$0xff]
      %v1057 = vld [vmem:[%s6 + $0x100] sm:$0xff]
      %v1058 = vld [vmem:[%s6 + $0x108] sm:$0xff]
      %v1059 = vld [vmem:[%s6 + $0x110] sm:$0xff]
      %v1060 = vld [vmem:[%s6 + $0x118] sm:$0xff]
      %v1061 = vld [vmem:[%s6 + $0x120] sm:$0xff]
      %v1062 = vld [vmem:[%s6 + $0x128] sm:$0xff]
      %v1063 = vld [vmem:[%s6 + $0x130] sm:$0xff]
      %v1064 = vld [vmem:[%s6 + $0x138] sm:$0xff]
      %v1065 = vld [vmem:[%s6 + $0x140] sm:$0xff]
      %v1066 = vld [vmem:[%s6 + $0x148] sm:$0xff]
      %v1067 = vld [vmem:[%s6 + $0x150] sm:$0xff]
      %v1068 = vld [vmem:[%s6 + $0x158] sm:$0xff]
      %v1069 = vld [vmem:[%s6 + $0x160] sm:$0xff]
      %v1070 = vld [vmem:[%s6 + $0x168] sm:$0xff]
      %v1071 = vld [vmem:[%s6 + $0x170] sm:$0xff]
      %v1072 = vld [vmem:[%s6 + $0x178] sm:$0xff]
      %v1073 = vld [vmem:[%s6 + $0x180] sm:$0xff]
      %v1074 = vld [vmem:[%s6 + $0x188] sm:$0xff]
      %v1075 = vld [vmem:[%s6 + $0x190] sm:$0xff]
      %v1076 = vld [vmem:[%s6 + $0x198] sm:$0xff]
      %v1077 = vld [vmem:[%s6 + $0x1a0] sm:$0xff]
      %v1078 = vld [vmem:[%s6 + $0x1a8] sm:$0xff]
      %v1079 = vld [vmem:[%s6 + $0x1b0] sm:$0xff]
      %v1080 = vld [vmem:[%s6 + $0x1b8] sm:$0xff]
      %v1081 = vld [vmem:[%s6 + $0x1c0] sm:$0xff]
      %v1082 = vld [vmem:[%s6 + $0x1c8] sm:$0xff]
      %v1083 = vld [vmem:[%s6 + $0x1d0] sm:$0xff]
      %v1084 = vld [vmem:[%s6 + $0x1d8] sm:$0xff]
      %v1085 = vld [vmem:[%s6 + $0x1e0] sm:$0xff]
      %v1086 = vld [vmem:[%s6 + $0x1e8] sm:$0xff]
      %v1087 = vld [vmem:[%s6 + $0x1f0] sm:$0xff]
      %v1088 = vld [vmem:[%s6 + $0x1f8] sm:$0xff]
      %1090 = vset.pattern.permute.xlu0 0
      %1091 = vperm.xlu0 %1090, %v1025
      %v1092 = vpop.permute.xlu0 %1091
      %1095 = vset.pattern.permute.xlu0 0
      %1096 = vperm.xlu0 %1095, %v1026
      %v1097 = vpop.permute.xlu0 %1096
      %1100 = vset.pattern.permute.xlu0 0
      %1101 = vperm.xlu0 %1100, %v1027
      %v1102 = vpop.permute.xlu0 %1101
      %1105 = vset.pattern.permute.xlu0 0
      %1106 = vperm.xlu0 %1105, %v1028
      %v1107 = vpop.permute.xlu0 %1106
      %1110 = vset.pattern.permute.xlu0 0
      %1111 = vperm.xlu0 %1110, %v1029
      %v1112 = vpop.permute.xlu0 %1111
      %1115 = vset.pattern.permute.xlu0 0
      %1116 = vperm.xlu0 %1115, %v1030
      %v1117 = vpop.permute.xlu0 %1116
      %1120 = vset.pattern.permute.xlu0 0
      %1121 = vperm.xlu0 %1120, %v1031
      %v1122 = vpop.permute.xlu0 %1121
      %1125 = vset.pattern.permute.xlu0 0
      %1126 = vperm.xlu0 %1125, %v1032
      %v1127 = vpop.permute.xlu0 %1126
      %1130 = vset.pattern.permute.xlu0 0
      %1131 = vperm.xlu0 %1130, %v1033
      %v1132 = vpop.permute.xlu0 %1131
      %1135 = vset.pattern.permute.xlu0 0
      %1136 = vperm.xlu0 %1135, %v1034
      %v1137 = vpop.permute.xlu0 %1136
      %1140 = vset.pattern.permute.xlu0 0
      %1141 = vperm.xlu0 %1140, %v1035
      %v1142 = vpop.permute.xlu0 %1141
      %1145 = vset.pattern.permute.xlu0 0
      %1146 = vperm.xlu0 %1145, %v1036
      %v1147 = vpop.permute.xlu0 %1146
      %1150 = vset.pattern.permute.xlu0 0
      %1151 = vperm.xlu0 %1150, %v1037
      %v1152 = vpop.permute.xlu0 %1151
      %1155 = vset.pattern.permute.xlu0 0
      %1156 = vperm.xlu0 %1155, %v1038
      %v1157 = vpop.permute.xlu0 %1156
      %1160 = vset.pattern.permute.xlu0 0
      %1161 = vperm.xlu0 %1160, %v1039
      %v1162 = vpop.permute.xlu0 %1161
      %1165 = vset.pattern.permute.xlu0 0
      %1166 = vperm.xlu0 %1165, %v1040
      %v1167 = vpop.permute.xlu0 %1166
      %1170 = vset.pattern.permute.xlu0 0
      %1171 = vperm.xlu0 %1170, %v1041
      %v1172 = vpop.permute.xlu0 %1171
      %1175 = vset.pattern.permute.xlu0 0
      %1176 = vperm.xlu0 %1175, %v1042
      %v1177 = vpop.permute.xlu0 %1176
      %1180 = vset.pattern.permute.xlu0 0
      %1181 = vperm.xlu0 %1180, %v1043
      %v1182 = vpop.permute.xlu0 %1181
      %1185 = vset.pattern.permute.xlu0 0
      %1186 = vperm.xlu0 %1185, %v1044
      %v1187 = vpop.permute.xlu0 %1186
      %1190 = vset.pattern.permute.xlu0 0
      %1191 = vperm.xlu0 %1190, %v1045
      %v1192 = vpop.permute.xlu0 %1191
      %1195 = vset.pattern.permute.xlu0 0
      %1196 = vperm.xlu0 %1195, %v1046
      %v1197 = vpop.permute.xlu0 %1196
      %1200 = vset.pattern.permute.xlu0 0
      %1201 = vperm.xlu0 %1200, %v1047
      %v1202 = vpop.permute.xlu0 %1201
      %1205 = vset.pattern.permute.xlu0 0
      %1206 = vperm.xlu0 %1205, %v1048
      %v1207 = vpop.permute.xlu0 %1206
      %1210 = vset.pattern.permute.xlu0 0
      %1211 = vperm.xlu0 %1210, %v1049
      %v1212 = vpop.permute.xlu0 %1211
      %1215 = vset.pattern.permute.xlu0 0
      %1216 = vperm.xlu0 %1215, %v1050
      %v1217 = vpop.permute.xlu0 %1216
      %1220 = vset.pattern.permute.xlu0 0
      %1221 = vperm.xlu0 %1220, %v1051
      %v1222 = vpop.permute.xlu0 %1221
      %1225 = vset.pattern.permute.xlu0 0
      %1226 = vperm.xlu0 %1225, %v1052
      %v1227 = vpop.permute.xlu0 %1226
      %1230 = vset.pattern.permute.xlu0 0
      %1231 = vperm.xlu0 %1230, %v1053
      %v1232 = vpop.permute.xlu0 %1231
      %1235 = vset.pattern.permute.xlu0 0
      %1236 = vperm.xlu0 %1235, %v1054
      %v1237 = vpop.permute.xlu0 %1236
      %1240 = vset.pattern.permute.xlu0 0
      %1241 = vperm.xlu0 %1240, %v1055
      %v1242 = vpop.permute.xlu0 %1241
      %1245 = vset.pattern.permute.xlu0 0
      %1246 = vperm.xlu0 %1245, %v1056
      %v1247 = vpop.permute.xlu0 %1246
      %1250 = vset.pattern.permute.xlu0 0
      %1251 = vperm.xlu0 %1250, %v1057
      %v1252 = vpop.permute.xlu0 %1251
      %1255 = vset.pattern.permute.xlu0 0
      %1256 = vperm.xlu0 %1255, %v1058
      %v1257 = vpop.permute.xlu0 %1256
      %1260 = vset.pattern.permute.xlu0 0
      %1261 = vperm.xlu0 %1260, %v1059
      %v1262 = vpop.permute.xlu0 %1261
      %1265 = vset.pattern.permute.xlu0 0
      %1266 = vperm.xlu0 %1265, %v1060
      %v1267 = vpop.permute.xlu0 %1266
      %1270 = vset.pattern.permute.xlu0 0
      %1271 = vperm.xlu0 %1270, %v1061
      %v1272 = vpop.permute.xlu0 %1271
      %1275 = vset.pattern.permute.xlu0 0
      %1276 = vperm.xlu0 %1275, %v1062
      %v1277 = vpop.permute.xlu0 %1276
      %1280 = vset.pattern.permute.xlu0 0
      %1281 = vperm.xlu0 %1280, %v1063
      %v1282 = vpop.permute.xlu0 %1281
      %1285 = vset.pattern.permute.xlu0 0
      %1286 = vperm.xlu0 %1285, %v1064
      %v1287 = vpop.permute.xlu0 %1286
      %1290 = vset.pattern.permute.xlu0 0
      %1291 = vperm.xlu0 %1290, %v1065
      %v1292 = vpop.permute.xlu0 %1291
      %1295 = vset.pattern.permute.xlu0 0
      %1296 = vperm.xlu0 %1295, %v1066
      %v1297 = vpop.permute.xlu0 %1296
      %1300 = vset.pattern.permute.xlu0 0
      %1301 = vperm.xlu0 %1300, %v1067
      %v1302 = vpop.permute.xlu0 %1301
      %1305 = vset.pattern.permute.xlu0 0
      %1306 = vperm.xlu0 %1305, %v1068
      %v1307 = vpop.permute.xlu0 %1306
      %1310 = vset.pattern.permute.xlu0 0
      %1311 = vperm.xlu0 %1310, %v1069
      %v1312 = vpop.permute.xlu0 %1311
      %1315 = vset.pattern.permute.xlu0 0
      %1316 = vperm.xlu0 %1315, %v1070
      %v1317 = vpop.permute.xlu0 %1316
      %1320 = vset.pattern.permute.xlu0 0
      %1321 = vperm.xlu0 %1320, %v1071
      %v1322 = vpop.permute.xlu0 %1321
      %1325 = vset.pattern.permute.xlu0 0
      %1326 = vperm.xlu0 %1325, %v1072
      %v1327 = vpop.permute.xlu0 %1326
      %1330 = vset.pattern.permute.xlu0 0
      %1331 = vperm.xlu0 %1330, %v1073
      %v1332 = vpop.permute.xlu0 %1331
      %1335 = vset.pattern.permute.xlu0 0
      %1336 = vperm.xlu0 %1335, %v1074
      %v1337 = vpop.permute.xlu0 %1336
      %1340 = vset.pattern.permute.xlu0 0
      %1341 = vperm.xlu0 %1340, %v1075
      %v1342 = vpop.permute.xlu0 %1341
      %1345 = vset.pattern.permute.xlu0 0
      %1346 = vperm.xlu0 %1345, %v1076
      %v1347 = vpop.permute.xlu0 %1346
      %1350 = vset.pattern.permute.xlu0 0
      %1351 = vperm.xlu0 %1350, %v1077
      %v1352 = vpop.permute.xlu0 %1351
      %1355 = vset.pattern.permute.xlu0 0
      %1356 = vperm.xlu0 %1355, %v1078
      %v1357 = vpop.permute.xlu0 %1356
      %1360 = vset.pattern.permute.xlu0 0
      %1361 = vperm.xlu0 %1360, %v1079
      %v1362 = vpop.permute.xlu0 %1361
      %1365 = vset.pattern.permute.xlu0 0
      %1366 = vperm.xlu0 %1365, %v1080
      %v1367 = vpop.permute.xlu0 %1366
      %1370 = vset.pattern.permute.xlu0 0
      %1371 = vperm.xlu0 %1370, %v1081
      %v1372 = vpop.permute.xlu0 %1371
      %1375 = vset.pattern.permute.xlu0 0
      %1376 = vperm.xlu0 %1375, %v1082
      %v1377 = vpop.permute.xlu0 %1376
      %1380 = vset.pattern.permute.xlu0 0
      %1381 = vperm.xlu0 %1380, %v1083
      %v1382 = vpop.permute.xlu0 %1381
      %1385 = vset.pattern.permute.xlu0 0
      %1386 = vperm.xlu0 %1385, %v1084
      %v1387 = vpop.permute.xlu0 %1386
      %1390 = vset.pattern.permute.xlu0 0
      %1391 = vperm.xlu0 %1390, %v1085
      %v1392 = vpop.permute.xlu0 %1391
      %1395 = vset.pattern.permute.xlu0 0
      %1396 = vperm.xlu0 %1395, %v1086
      %v1397 = vpop.permute.xlu0 %1396
      %1400 = vset.pattern.permute.xlu0 0
      %1401 = vperm.xlu0 %1400, %v1087
      %v1402 = vpop.permute.xlu0 %1401
      %1405 = vset.pattern.permute.xlu0 0
      %1406 = vperm.xlu0 %1405, %v1088
      %v1407 = vpop.permute.xlu0 %1406
      %1409 = vmatprep.subr.mxu0 0.0
      %1410 = vmatpush1.msra.mxu0 %v960
      %1411 = vmatprep.subr.mxu0 0.0
      %1412 = vmatpush1.msra.mxu0 %v959
      %1413 = vmatprep.subr.mxu0 0.0
      %1414 = vmatpush1.msra.mxu0 %v958
      %1415 = vmatprep.subr.mxu0 0.0
      %1416 = vmatpush1.msra.mxu0 %v957
      %1417 = vmatprep.subr.mxu0 0.0
      %1418 = vmatpush1.msra.mxu0 %v956
      %1419 = vmatprep.subr.mxu0 0.0
      %1420 = vmatpush1.msra.mxu0 %v955
      %1421 = vmatprep.subr.mxu0 0.0
      %1422 = vmatpush1.msra.mxu0 %v954
      %1423 = vmatprep.subr.mxu0 0.0
      %1424 = vmatpush1.msra.mxu0 %v953
      %1425 = vmatprep.subr.mxu0 0.0
      %1426 = vmatpush1.msra.mxu0 %v952
      %1427 = vmatprep.subr.mxu0 0.0
      %1428 = vmatpush1.msra.mxu0 %v951
      %1429 = vmatprep.subr.mxu0 0.0
      %1430 = vmatpush1.msra.mxu0 %v950
      %1431 = vmatprep.subr.mxu0 0.0
      %1432 = vmatpush1.msra.mxu0 %v949
      %1433 = vmatprep.subr.mxu0 0.0
      %1434 = vmatpush1.msra.mxu0 %v948
      %1435 = vmatprep.subr.mxu0 0.0
      %1436 = vmatpush1.msra.mxu0 %v947
      %1437 = vmatprep.subr.mxu0 0.0
      %1438 = vmatpush1.msra.mxu0 %v946
      %1439 = vmatprep.subr.mxu0 0.0
      %1440 = vmatpush1.msra.mxu0 %v945
      %1441 = vmatprep.subr.mxu0 0.0
      %1442 = vmatpush2.msra.mxu0 0.0
      %1443 = vmatprep.subr.mxu0 0.0
      %1444 = vmatpush2.msra.mxu0 0.0
      %1445 = vmatprep.subr.mxu0 0.0
      %1446 = vmatpush2.msra.mxu0 0.0
      %1447 = vmatprep.subr.mxu0 0.0
      %1448 = vmatpush2.msra.mxu0 0.0
      %1449 = vmatprep.subr.mxu0 0.0
      %1450 = vmatpush2.msra.mxu0 0.0
      %1451 = vmatprep.subr.mxu0 0.0
      %1452 = vmatpush2.msra.mxu0 0.0
      %1453 = vmatprep.subr.mxu0 0.0
      %1454 = vmatpush2.msra.mxu0 0.0
      %1455 = vmatprep.subr.mxu0 0.0
      %1456 = vmatpush2.msra.mxu0 0.0
      %1457 = vmatprep.subr.mxu0 0.0
      %1458 = vmatpush2.msra.mxu0 0.0
      %1459 = vmatprep.subr.mxu0 0.0
      %1460 = vmatpush2.msra.mxu0 0.0
      %1461 = vmatprep.subr.mxu0 0.0
      %1462 = vmatpush2.msra.mxu0 0.0
      %1463 = vmatprep.subr.mxu0 0.0
      %1464 = vmatpush2.msra.mxu0 0.0
      %1465 = vmatprep.subr.mxu0 0.0
      %1466 = vmatpush2.msra.mxu0 0.0
      %1467 = vmatprep.subr.mxu0 0.0
      %1468 = vmatpush2.msra.mxu0 0.0
      %1469 = vmatprep.subr.mxu0 0.0
      %1470 = vmatpush2.msra.mxu0 0.0
      %1471 = vmatprep.subr.mxu0 0.0
      %1472 = vmatpush2.msra.mxu0 0.0
      %1473 = vmatprep.mubr.f32.mxu0 0.0
      %1474 = vmatmul.mubr.f32.gmra.mxu0 %v961
      %v1475 = vpop.f32.mrf.mxu0
      %v1476 = vadd.f32 %v1092, %v1475
      %v1477 = vpop.f32.mrf.mxu0
      %1478 = vmatprep.mubr.f32.mxu0 0.0
      %1479 = vmatmul.mubr.f32.gmra.mxu0 %v962
      %v1480 = vpop.f32.mrf.mxu0
      %v1481 = vadd.f32 %v1097, %v1480
      %v1482 = vpop.f32.mrf.mxu0
      %1483 = vmatprep.mubr.f32.mxu0 0.0
      %1484 = vmatmul.mubr.f32.gmra.mxu0 %v963
      %v1485 = vpop.f32.mrf.mxu0
      %v1486 = vadd.f32 %v1102, %v1485
      %v1487 = vpop.f32.mrf.mxu0
      %1488 = vmatprep.mubr.f32.mxu0 0.0
      %1489 = vmatmul.mubr.f32.gmra.mxu0 %v964
      %v1490 = vpop.f32.mrf.mxu0
      %v1491 = vadd.f32 %v1107, %v1490
      %v1492 = vpop.f32.mrf.mxu0
      %1493 = vmatprep.mubr.f32.mxu0 0.0
      %1494 = vmatmul.mubr.f32.gmra.mxu0 %v965
      %v1495 = vpop.f32.mrf.mxu0
      %v1496 = vadd.f32 %v1112, %v1495
      %v1497 = vpop.f32.mrf.mxu0
      %1498 = vmatprep.mubr.f32.mxu0 0.0
      %1499 = vmatmul.mubr.f32.gmra.mxu0 %v966
      %v1500 = vpop.f32.mrf.mxu0
      %v1501 = vadd.f32 %v1117, %v1500
      %v1502 = vpop.f32.mrf.mxu0
      %1503 = vmatprep.mubr.f32.mxu0 0.0
      %1504 = vmatmul.mubr.f32.gmra.mxu0 %v967
      %v1505 = vpop.f32.mrf.mxu0
      %v1506 = vadd.f32 %v1122, %v1505
      %v1507 = vpop.f32.mrf.mxu0
      %1508 = vmatprep.mubr.f32.mxu0 0.0
      %1509 = vmatmul.mubr.f32.gmra.mxu0 %v968
      %v1510 = vpop.f32.mrf.mxu0
      %v1511 = vadd.f32 %v1127, %v1510
      %v1512 = vpop.f32.mrf.mxu0
      %1513 = vmatprep.mubr.f32.mxu0 0.0
      %1514 = vmatmul.mubr.f32.gmra.mxu0 %v969
      %v1515 = vpop.f32.mrf.mxu0
      %v1516 = vadd.f32 %v1132, %v1515
      %v1517 = vpop.f32.mrf.mxu0
      %1518 = vmatprep.mubr.f32.mxu0 0.0
      %1519 = vmatmul.mubr.f32.gmra.mxu0 %v970
      %v1520 = vpop.f32.mrf.mxu0
      %v1521 = vadd.f32 %v1137, %v1520
      %v1522 = vpop.f32.mrf.mxu0
      %1523 = vmatprep.mubr.f32.mxu0 0.0
      %1524 = vmatmul.mubr.f32.gmra.mxu0 %v971
      %v1525 = vpop.f32.mrf.mxu0
      %v1526 = vadd.f32 %v1142, %v1525
      %v1527 = vpop.f32.mrf.mxu0
      %1528 = vmatprep.mubr.f32.mxu0 0.0
      %1529 = vmatmul.mubr.f32.gmra.mxu0 %v972
      %v1530 = vpop.f32.mrf.mxu0
      %v1531 = vadd.f32 %v1147, %v1530
      %v1532 = vpop.f32.mrf.mxu0
      %1533 = vmatprep.mubr.f32.mxu0 0.0
      %1534 = vmatmul.mubr.f32.gmra.mxu0 %v973
      %v1535 = vpop.f32.mrf.mxu0
      %v1536 = vadd.f32 %v1152, %v1535
      %v1537 = vpop.f32.mrf.mxu0
      %1538 = vmatprep.mubr.f32.mxu0 0.0
      %1539 = vmatmul.mubr.f32.gmra.mxu0 %v974
      %v1540 = vpop.f32.mrf.mxu0
      %v1541 = vadd.f32 %v1157, %v1540
      %v1542 = vpop.f32.mrf.mxu0
      %1543 = vmatprep.mubr.f32.mxu0 0.0
      %1544 = vmatmul.mubr.f32.gmra.mxu0 %v975
      %v1545 = vpop.f32.mrf.mxu0
      %v1546 = vadd.f32 %v1162, %v1545
      %v1547 = vpop.f32.mrf.mxu0
      %1548 = vmatprep.mubr.f32.mxu0 0.0
      %1549 = vmatmul.mubr.f32.gmra.mxu0 %v976
      %v1550 = vpop.f32.mrf.mxu0
      %v1551 = vadd.f32 %v1167, %v1550
      %v1552 = vpop.f32.mrf.mxu0
      %1553 = vmatprep.mubr.f32.mxu0 0.0
      %1554 = vmatmul.mubr.f32.gmra.mxu0 %v977
      %v1555 = vpop.f32.mrf.mxu0
      %v1556 = vadd.f32 %v1172, %v1555
      %v1557 = vpop.f32.mrf.mxu0
      %1558 = vmatprep.mubr.f32.mxu0 0.0
      %1559 = vmatmul.mubr.f32.gmra.mxu0 %v978
      %v1560 = vpop.f32.mrf.mxu0
      %v1561 = vadd.f32 %v1177, %v1560
      %v1562 = vpop.f32.mrf.mxu0
      %1563 = vmatprep.mubr.f32.mxu0 0.0
      %1564 = vmatmul.mubr.f32.gmra.mxu0 %v979
      %v1565 = vpop.f32.mrf.mxu0
      %v1566 = vadd.f32 %v1182, %v1565
      %v1567 = vpop.f32.mrf.mxu0
      %1568 = vmatprep.mubr.f32.mxu0 0.0
      %1569 = vmatmul.mubr.f32.gmra.mxu0 %v980
      %v1570 = vpop.f32.mrf.mxu0
      %v1571 = vadd.f32 %v1187, %v1570
      %v1572 = vpop.f32.mrf.mxu0
      %1573 = vmatprep.mubr.f32.mxu0 0.0
      %1574 = vmatmul.mubr.f32.gmra.mxu0 %v981
      %v1575 = vpop.f32.mrf.mxu0
      %v1576 = vadd.f32 %v1192, %v1575
      %v1577 = vpop.f32.mrf.mxu0
      %1578 = vmatprep.mubr.f32.mxu0 0.0
      %1579 = vmatmul.mubr.f32.gmra.mxu0 %v982
      %v1580 = vpop.f32.mrf.mxu0
      %v1581 = vadd.f32 %v1197, %v1580
      %v1582 = vpop.f32.mrf.mxu0
      %1583 = vmatprep.mubr.f32.mxu0 0.0
      %1584 = vmatmul.mubr.f32.gmra.mxu0 %v983
      %v1585 = vpop.f32.mrf.mxu0
      %v1586 = vadd.f32 %v1202, %v1585
      %v1587 = vpop.f32.mrf.mxu0
      %1588 = vmatprep.mubr.f32.mxu0 0.0
      %1589 = vmatmul.mubr.f32.gmra.mxu0 %v984
      %v1590 = vpop.f32.mrf.mxu0
      %v1591 = vadd.f32 %v1207, %v1590
      %v1592 = vpop.f32.mrf.mxu0
      %1593 = vmatprep.mubr.f32.mxu0 0.0
      %1594 = vmatmul.mubr.f32.gmra.mxu0 %v985
      %v1595 = vpop.f32.mrf.mxu0
      %v1596 = vadd.f32 %v1212, %v1595
      %v1597 = vpop.f32.mrf.mxu0
      %1598 = vmatprep.mubr.f32.mxu0 0.0
      %1599 = vmatmul.mubr.f32.gmra.mxu0 %v986
      %v1600 = vpop.f32.mrf.mxu0
      %v1601 = vadd.f32 %v1217, %v1600
      %v1602 = vpop.f32.mrf.mxu0
      %1603 = vmatprep.mubr.f32.mxu0 0.0
      %1604 = vmatmul.mubr.f32.gmra.mxu0 %v987
      %v1605 = vpop.f32.mrf.mxu0
      %v1606 = vadd.f32 %v1222, %v1605
      %v1607 = vpop.f32.mrf.mxu0
      %1608 = vmatprep.mubr.f32.mxu0 0.0
      %1609 = vmatmul.mubr.f32.gmra.mxu0 %v988
      %v1610 = vpop.f32.mrf.mxu0
      %v1611 = vadd.f32 %v1227, %v1610
      %v1612 = vpop.f32.mrf.mxu0
      %1613 = vmatprep.mubr.f32.mxu0 0.0
      %1614 = vmatmul.mubr.f32.gmra.mxu0 %v989
      %v1615 = vpop.f32.mrf.mxu0
      %v1616 = vadd.f32 %v1232, %v1615
      %v1617 = vpop.f32.mrf.mxu0
      %1618 = vmatprep.mubr.f32.mxu0 0.0
      %1619 = vmatmul.mubr.f32.gmra.mxu0 %v990
      %v1620 = vpop.f32.mrf.mxu0
      %v1621 = vadd.f32 %v1237, %v1620
      %v1622 = vpop.f32.mrf.mxu0
      %1623 = vmatprep.mubr.f32.mxu0 0.0
      %1624 = vmatmul.mubr.f32.gmra.mxu0 %v991
      %v1625 = vpop.f32.mrf.mxu0
      %v1626 = vadd.f32 %v1242, %v1625
      %v1627 = vpop.f32.mrf.mxu0
      %1628 = vmatprep.mubr.f32.mxu0 0.0
      %1629 = vmatmul.mubr.f32.gmra.mxu0 %v992
      %v1630 = vpop.f32.mrf.mxu0
      %v1631 = vadd.f32 %v1247, %v1630
      %v1632 = vpop.f32.mrf.mxu0
      %1633 = vmatprep.mubr.f32.mxu0 0.0
      %1634 = vmatmul.mubr.f32.gmra.mxu0 %v993
      %v1635 = vpop.f32.mrf.mxu0
      %v1636 = vadd.f32 %v1252, %v1635
      %v1637 = vpop.f32.mrf.mxu0
      %1638 = vmatprep.mubr.f32.mxu0 0.0
      %1639 = vmatmul.mubr.f32.gmra.mxu0 %v994
      %v1640 = vpop.f32.mrf.mxu0
      %v1641 = vadd.f32 %v1257, %v1640
      %v1642 = vpop.f32.mrf.mxu0
      %1643 = vmatprep.mubr.f32.mxu0 0.0
      %1644 = vmatmul.mubr.f32.gmra.mxu0 %v995
      %v1645 = vpop.f32.mrf.mxu0
      %v1646 = vadd.f32 %v1262, %v1645
      %v1647 = vpop.f32.mrf.mxu0
      %1648 = vmatprep.mubr.f32.mxu0 0.0
      %1649 = vmatmul.mubr.f32.gmra.mxu0 %v996
      %v1650 = vpop.f32.mrf.mxu0
      %v1651 = vadd.f32 %v1267, %v1650
      %v1652 = vpop.f32.mrf.mxu0
      %1653 = vmatprep.mubr.f32.mxu0 0.0
      %1654 = vmatmul.mubr.f32.gmra.mxu0 %v997
      %v1655 = vpop.f32.mrf.mxu0
      %v1656 = vadd.f32 %v1272, %v1655
      %v1657 = vpop.f32.mrf.mxu0
      %1658 = vmatprep.mubr.f32.mxu0 0.0
      %1659 = vmatmul.mubr.f32.gmra.mxu0 %v998
      %v1660 = vpop.f32.mrf.mxu0
      %v1661 = vadd.f32 %v1277, %v1660
      %v1662 = vpop.f32.mrf.mxu0
      %1663 = vmatprep.mubr.f32.mxu0 0.0
      %1664 = vmatmul.mubr.f32.gmra.mxu0 %v999
      %v1665 = vpop.f32.mrf.mxu0
      %v1666 = vadd.f32 %v1282, %v1665
      %v1667 = vpop.f32.mrf.mxu0
      %1668 = vmatprep.mubr.f32.mxu0 0.0
      %1669 = vmatmul.mubr.f32.gmra.mxu0 %v1000
      %v1670 = vpop.f32.mrf.mxu0
      %v1671 = vadd.f32 %v1287, %v1670
      %v1672 = vpop.f32.mrf.mxu0
      %1673 = vmatprep.mubr.f32.mxu0 0.0
      %1674 = vmatmul.mubr.f32.gmra.mxu0 %v1001
      %v1675 = vpop.f32.mrf.mxu0
      %v1676 = vadd.f32 %v1292, %v1675
      %v1677 = vpop.f32.mrf.mxu0
      %1678 = vmatprep.mubr.f32.mxu0 0.0
      %1679 = vmatmul.mubr.f32.gmra.mxu0 %v1002
      %v1680 = vpop.f32.mrf.mxu0
      %v1681 = vadd.f32 %v1297, %v1680
      %v1682 = vpop.f32.mrf.mxu0
      %1683 = vmatprep.mubr.f32.mxu0 0.0
      %1684 = vmatmul.mubr.f32.gmra.mxu0 %v1003
      %v1685 = vpop.f32.mrf.mxu0
      %v1686 = vadd.f32 %v1302, %v1685
      %v1687 = vpop.f32.mrf.mxu0
      %1688 = vmatprep.mubr.f32.mxu0 0.0
      %1689 = vmatmul.mubr.f32.gmra.mxu0 %v1004
      %v1690 = vpop.f32.mrf.mxu0
      %v1691 = vadd.f32 %v1307, %v1690
      %v1692 = vpop.f32.mrf.mxu0
      %1693 = vmatprep.mubr.f32.mxu0 0.0
      %1694 = vmatmul.mubr.f32.gmra.mxu0 %v1005
      %v1695 = vpop.f32.mrf.mxu0
      %v1696 = vadd.f32 %v1312, %v1695
      %v1697 = vpop.f32.mrf.mxu0
      %1698 = vmatprep.mubr.f32.mxu0 0.0
      %1699 = vmatmul.mubr.f32.gmra.mxu0 %v1006
      %v1700 = vpop.f32.mrf.mxu0
      %v1701 = vadd.f32 %v1317, %v1700
      %v1702 = vpop.f32.mrf.mxu0
      %1703 = vmatprep.mubr.f32.mxu0 0.0
      %1704 = vmatmul.mubr.f32.gmra.mxu0 %v1007
      %v1705 = vpop.f32.mrf.mxu0
      %v1706 = vadd.f32 %v1322, %v1705
      %v1707 = vpop.f32.mrf.mxu0
      %1708 = vmatprep.mubr.f32.mxu0 0.0
      %1709 = vmatmul.mubr.f32.gmra.mxu0 %v1008
      %v1710 = vpop.f32.mrf.mxu0
      %v1711 = vadd.f32 %v1327, %v1710
      %v1712 = vpop.f32.mrf.mxu0
      %1713 = vmatprep.mubr.f32.mxu0 0.0
      %1714 = vmatmul.mubr.f32.gmra.mxu0 %v1009
      %v1715 = vpop.f32.mrf.mxu0
      %v1716 = vadd.f32 %v1332, %v1715
      %v1717 = vpop.f32.mrf.mxu0
      %1718 = vmatprep.mubr.f32.mxu0 0.0
      %1719 = vmatmul.mubr.f32.gmra.mxu0 %v1010
      %v1720 = vpop.f32.mrf.mxu0
      %v1721 = vadd.f32 %v1337, %v1720
      %v1722 = vpop.f32.mrf.mxu0
      %1723 = vmatprep.mubr.f32.mxu0 0.0
      %1724 = vmatmul.mubr.f32.gmra.mxu0 %v1011
      %v1725 = vpop.f32.mrf.mxu0
      %v1726 = vadd.f32 %v1342, %v1725
      %v1727 = vpop.f32.mrf.mxu0
      %1728 = vmatprep.mubr.f32.mxu0 0.0
      %1729 = vmatmul.mubr.f32.gmra.mxu0 %v1012
      %v1730 = vpop.f32.mrf.mxu0
      %v1731 = vadd.f32 %v1347, %v1730
      %v1732 = vpop.f32.mrf.mxu0
      %1733 = vmatprep.mubr.f32.mxu0 0.0
      %1734 = vmatmul.mubr.f32.gmra.mxu0 %v1013
      %v1735 = vpop.f32.mrf.mxu0
      %v1736 = vadd.f32 %v1352, %v1735
      %v1737 = vpop.f32.mrf.mxu0
      %1738 = vmatprep.mubr.f32.mxu0 0.0
      %1739 = vmatmul.mubr.f32.gmra.mxu0 %v1014
      %v1740 = vpop.f32.mrf.mxu0
      %v1741 = vadd.f32 %v1357, %v1740
      %v1742 = vpop.f32.mrf.mxu0
      %1743 = vmatprep.mubr.f32.mxu0 0.0
      %1744 = vmatmul.mubr.f32.gmra.mxu0 %v1015
      %v1745 = vpop.f32.mrf.mxu0
      %v1746 = vadd.f32 %v1362, %v1745
      %v1747 = vpop.f32.mrf.mxu0
      %1748 = vmatprep.mubr.f32.mxu0 0.0
      %1749 = vmatmul.mubr.f32.gmra.mxu0 %v1016
      %v1750 = vpop.f32.mrf.mxu0
      %v1751 = vadd.f32 %v1367, %v1750
      %v1752 = vpop.f32.mrf.mxu0
      %1753 = vmatprep.mubr.f32.mxu0 0.0
      %1754 = vmatmul.mubr.f32.gmra.mxu0 %v1017
      %v1755 = vpop.f32.mrf.mxu0
      %v1756 = vadd.f32 %v1372, %v1755
      %v1757 = vpop.f32.mrf.mxu0
      %1758 = vmatprep.mubr.f32.mxu0 0.0
      %1759 = vmatmul.mubr.f32.gmra.mxu0 %v1018
      %v1760 = vpop.f32.mrf.mxu0
      %v1761 = vadd.f32 %v1377, %v1760
      %v1762 = vpop.f32.mrf.mxu0
      %1763 = vmatprep.mubr.f32.mxu0 0.0
      %1764 = vmatmul.mubr.f32.gmra.mxu0 %v1019
      %v1765 = vpop.f32.mrf.mxu0
      %v1766 = vadd.f32 %v1382, %v1765
      %v1767 = vpop.f32.mrf.mxu0
      %1768 = vmatprep.mubr.f32.mxu0 0.0
      %1769 = vmatmul.mubr.f32.gmra.mxu0 %v1020
      %v1770 = vpop.f32.mrf.mxu0
      %v1771 = vadd.f32 %v1387, %v1770
      %v1772 = vpop.f32.mrf.mxu0
      %1773 = vmatprep.mubr.f32.mxu0 0.0
      %1774 = vmatmul.mubr.f32.gmra.mxu0 %v1021
      %v1775 = vpop.f32.mrf.mxu0
      %v1776 = vadd.f32 %v1392, %v1775
      %v1777 = vpop.f32.mrf.mxu0
      %1778 = vmatprep.mubr.f32.mxu0 0.0
      %1779 = vmatmul.mubr.f32.gmra.mxu0 %v1022
      %v1780 = vpop.f32.mrf.mxu0
      %v1781 = vadd.f32 %v1397, %v1780
      %v1782 = vpop.f32.mrf.mxu0
      %1783 = vmatprep.mubr.f32.mxu0 0.0
      %1784 = vmatmul.mubr.f32.gmra.mxu0 %v1023
      %v1785 = vpop.f32.mrf.mxu0
      %v1786 = vadd.f32 %v1402, %v1785
      %v1787 = vpop.f32.mrf.mxu0
      %1788 = vmatprep.mubr.f32.mxu0 0.0
      %1789 = vmatmul.mubr.f32.gmra.mxu0 %v1024
      %v1790 = vpop.f32.mrf.mxu0
      %v1791 = vadd.f32 %v1407, %v1790
      %v1792 = vpop.f32.mrf.mxu0
      %1793 = vdwg.mxu0
      %v1794 = vmax.f32 %v1476, 0.0
      %v1795 = vmax.f32 %v1481, 0.0
      %v1796 = vmax.f32 %v1486, 0.0
      %v1797 = vmax.f32 %v1491, 0.0
      %v1798 = vmax.f32 %v1496, 0.0
      %v1799 = vmax.f32 %v1501, 0.0
      %v1800 = vmax.f32 %v1506, 0.0
      %v1801 = vmax.f32 %v1511, 0.0
      %v1802 = vmax.f32 %v1516, 0.0
      %v1803 = vmax.f32 %v1521, 0.0
      %v1804 = vmax.f32 %v1526, 0.0
      %v1805 = vmax.f32 %v1531, 0.0
      %v1806 = vmax.f32 %v1536, 0.0
      %v1807 = vmax.f32 %v1541, 0.0
      %v1808 = vmax.f32 %v1546, 0.0
      %v1809 = vmax.f32 %v1551, 0.0
      %v1810 = vmax.f32 %v1556, 0.0
      %v1811 = vmax.f32 %v1561, 0.0
      %v1812 = vmax.f32 %v1566, 0.0
      %v1813 = vmax.f32 %v1571, 0.0
      %v1814 = vmax.f32 %v1576, 0.0
      %v1815 = vmax.f32 %v1581, 0.0
      %v1816 = vmax.f32 %v1586, 0.0
      %v1817 = vmax.f32 %v1591, 0.0
      %v1818 = vmax.f32 %v1596, 0.0
      %v1819 = vmax.f32 %v1601, 0.0
      %v1820 = vmax.f32 %v1606, 0.0
      %v1821 = vmax.f32 %v1611, 0.0
      %v1822 = vmax.f32 %v1616, 0.0
      %v1823 = vmax.f32 %v1621, 0.0
      %v1824 = vmax.f32 %v1626, 0.0
      %v1825 = vmax.f32 %v1631, 0.0
      %v1826 = vmax.f32 %v1636, 0.0
      %v1827 = vmax.f32 %v1641, 0.0
      %v1828 = vmax.f32 %v1646, 0.0
      %v1829 = vmax.f32 %v1651, 0.0
      %v1830 = vmax.f32 %v1656, 0.0
      %v1831 = vmax.f32 %v1661, 0.0
      %v1832 = vmax.f32 %v1666, 0.0
      %v1833 = vmax.f32 %v1671, 0.0
      %v1834 = vmax.f32 %v1676, 0.0
      %v1835 = vmax.f32 %v1681, 0.0
      %v1836 = vmax.f32 %v1686, 0.0
      %v1837 = vmax.f32 %v1691, 0.0
      %v1838 = vmax.f32 %v1696, 0.0
      %v1839 = vmax.f32 %v1701, 0.0
      %v1840 = vmax.f32 %v1706, 0.0
      %v1841 = vmax.f32 %v1711, 0.0
      %v1842 = vmax.f32 %v1716, 0.0
      %v1843 = vmax.f32 %v1721, 0.0
      %v1844 = vmax.f32 %v1726, 0.0
      %v1845 = vmax.f32 %v1731, 0.0
      %v1846 = vmax.f32 %v1736, 0.0
      %v1847 = vmax.f32 %v1741, 0.0
      %v1848 = vmax.f32 %v1746, 0.0
      %v1849 = vmax.f32 %v1751, 0.0
      %v1850 = vmax.f32 %v1756, 0.0
      %v1851 = vmax.f32 %v1761, 0.0
      %v1852 = vmax.f32 %v1766, 0.0
      %v1853 = vmax.f32 %v1771, 0.0
      %v1854 = vmax.f32 %v1776, 0.0
      %v1855 = vmax.f32 %v1781, 0.0
      %v1856 = vmax.f32 %v1786, 0.0
      %v1857 = vmax.f32 %v1791, 0.0
      %vm1858 = vcmask 130048
      %v1859 = vsel %vm1858, %v1794, -inf
      %1860 = vmax.xlane.f32.xlu0 %v1859
      %v1861 = vpop.xlane.xlu0 %1860
      %v1862 = vsel %vm1858, %v1795, -inf
      %1863 = vmax.xlane.f32.xlu0 %v1862
      %v1864 = vpop.xlane.xlu0 %1863
      %v1865 = vsel %vm1858, %v1796, -inf
      %1866 = vmax.xlane.f32.xlu0 %v1865
      %v1867 = vpop.xlane.xlu0 %1866
      %v1868 = vsel %vm1858, %v1797, -inf
      %1869 = vmax.xlane.f32.xlu0 %v1868
      %v1870 = vpop.xlane.xlu0 %1869
      %v1871 = vsel %vm1858, %v1798, -inf
      %1872 = vmax.xlane.f32.xlu0 %v1871
      %v1873 = vpop.xlane.xlu0 %1872
      %v1874 = vsel %vm1858, %v1799, -inf
      %1875 = vmax.xlane.f32.xlu0 %v1874
      %v1876 = vpop.xlane.xlu0 %1875
      %v1877 = vsel %vm1858, %v1800, -inf
      %1878 = vmax.xlane.f32.xlu0 %v1877
      %v1879 = vpop.xlane.xlu0 %1878
      %v1880 = vsel %vm1858, %v1801, -inf
      %1881 = vmax.xlane.f32.xlu0 %v1880
      %v1882 = vpop.xlane.xlu0 %1881
      %v1883 = vsel %vm1858, %v1802, -inf
      %1884 = vmax.xlane.f32.xlu0 %v1883
      %v1885 = vpop.xlane.xlu0 %1884
      %v1886 = vsel %vm1858, %v1803, -inf
      %1887 = vmax.xlane.f32.xlu0 %v1886
      %v1888 = vpop.xlane.xlu0 %1887
      %v1889 = vsel %vm1858, %v1804, -inf
      %1890 = vmax.xlane.f32.xlu0 %v1889
      %v1891 = vpop.xlane.xlu0 %1890
      %v1892 = vsel %vm1858, %v1805, -inf
      %1893 = vmax.xlane.f32.xlu0 %v1892
      %v1894 = vpop.xlane.xlu0 %1893
      %v1895 = vsel %vm1858, %v1806, -inf
      %1896 = vmax.xlane.f32.xlu0 %v1895
      %v1897 = vpop.xlane.xlu0 %1896
      %v1898 = vsel %vm1858, %v1807, -inf
      %1899 = vmax.xlane.f32.xlu0 %v1898
      %v1900 = vpop.xlane.xlu0 %1899
      %v1901 = vsel %vm1858, %v1808, -inf
      %1902 = vmax.xlane.f32.xlu0 %v1901
      %v1903 = vpop.xlane.xlu0 %1902
      %v1904 = vsel %vm1858, %v1809, -inf
      %1905 = vmax.xlane.f32.xlu0 %v1904
      %v1906 = vpop.xlane.xlu0 %1905
      %v1907 = vsel %vm1858, %v1810, -inf
      %1908 = vmax.xlane.f32.xlu0 %v1907
      %v1909 = vpop.xlane.xlu0 %1908
      %v1910 = vsel %vm1858, %v1811, -inf
      %1911 = vmax.xlane.f32.xlu0 %v1910
      %v1912 = vpop.xlane.xlu0 %1911
      %v1913 = vsel %vm1858, %v1812, -inf
      %1914 = vmax.xlane.f32.xlu0 %v1913
      %v1915 = vpop.xlane.xlu0 %1914
      %v1916 = vsel %vm1858, %v1813, -inf
      %1917 = vmax.xlane.f32.xlu0 %v1916
      %v1918 = vpop.xlane.xlu0 %1917
      %v1919 = vsel %vm1858, %v1814, -inf
      %1920 = vmax.xlane.f32.xlu0 %v1919
      %v1921 = vpop.xlane.xlu0 %1920
      %v1922 = vsel %vm1858, %v1815, -inf
      %1923 = vmax.xlane.f32.xlu0 %v1922
      %v1924 = vpop.xlane.xlu0 %1923
      %v1925 = vsel %vm1858, %v1816, -inf
      %1926 = vmax.xlane.f32.xlu0 %v1925
      %v1927 = vpop.xlane.xlu0 %1926
      %v1928 = vsel %vm1858, %v1817, -inf
      %1929 = vmax.xlane.f32.xlu0 %v1928
      %v1930 = vpop.xlane.xlu0 %1929
      %v1931 = vsel %vm1858, %v1818, -inf
      %1932 = vmax.xlane.f32.xlu0 %v1931
      %v1933 = vpop.xlane.xlu0 %1932
      %v1934 = vsel %vm1858, %v1819, -inf
      %1935 = vmax.xlane.f32.xlu0 %v1934
      %v1936 = vpop.xlane.xlu0 %1935
      %v1937 = vsel %vm1858, %v1820, -inf
      %1938 = vmax.xlane.f32.xlu0 %v1937
      %v1939 = vpop.xlane.xlu0 %1938
      %v1940 = vsel %vm1858, %v1821, -inf
      %1941 = vmax.xlane.f32.xlu0 %v1940
      %v1942 = vpop.xlane.xlu0 %1941
      %v1943 = vsel %vm1858, %v1822, -inf
      %1944 = vmax.xlane.f32.xlu0 %v1943
      %v1945 = vpop.xlane.xlu0 %1944
      %v1946 = vsel %vm1858, %v1823, -inf
      %1947 = vmax.xlane.f32.xlu0 %v1946
      %v1948 = vpop.xlane.xlu0 %1947
      %v1949 = vsel %vm1858, %v1824, -inf
      %1950 = vmax.xlane.f32.xlu0 %v1949
      %v1951 = vpop.xlane.xlu0 %1950
      %v1952 = vsel %vm1858, %v1825, -inf
      %1953 = vmax.xlane.f32.xlu0 %v1952
      %v1954 = vpop.xlane.xlu0 %1953
      %v1955 = vsel %vm1858, %v1826, -inf
      %1956 = vmax.xlane.f32.xlu0 %v1955
      %v1957 = vpop.xlane.xlu0 %1956
      %v1958 = vsel %vm1858, %v1827, -inf
      %1959 = vmax.xlane.f32.xlu0 %v1958
      %v1960 = vpop.xlane.xlu0 %1959
      %v1961 = vsel %vm1858, %v1828, -inf
      %1962 = vmax.xlane.f32.xlu0 %v1961
      %v1963 = vpop.xlane.xlu0 %1962
      %v1964 = vsel %vm1858, %v1829, -inf
      %1965 = vmax.xlane.f32.xlu0 %v1964
      %v1966 = vpop.xlane.xlu0 %1965
      %v1967 = vsel %vm1858, %v1830, -inf
      %1968 = vmax.xlane.f32.xlu0 %v1967
      %v1969 = vpop.xlane.xlu0 %1968
      %v1970 = vsel %vm1858, %v1831, -inf
      %1971 = vmax.xlane.f32.xlu0 %v1970
      %v1972 = vpop.xlane.xlu0 %1971
      %v1973 = vsel %vm1858, %v1832, -inf
      %1974 = vmax.xlane.f32.xlu0 %v1973
      %v1975 = vpop.xlane.xlu0 %1974
      %v1976 = vsel %vm1858, %v1833, -inf
      %1977 = vmax.xlane.f32.xlu0 %v1976
      %v1978 = vpop.xlane.xlu0 %1977
      %v1979 = vsel %vm1858, %v1834, -inf
      %1980 = vmax.xlane.f32.xlu0 %v1979
      %v1981 = vpop.xlane.xlu0 %1980
      %v1982 = vsel %vm1858, %v1835, -inf
      %1983 = vmax.xlane.f32.xlu0 %v1982
      %v1984 = vpop.xlane.xlu0 %1983
      %v1985 = vsel %vm1858, %v1836, -inf
      %1986 = vmax.xlane.f32.xlu0 %v1985
      %v1987 = vpop.xlane.xlu0 %1986
      %v1988 = vsel %vm1858, %v1837, -inf
      %1989 = vmax.xlane.f32.xlu0 %v1988
      %v1990 = vpop.xlane.xlu0 %1989
      %v1991 = vsel %vm1858, %v1838, -inf
      %1992 = vmax.xlane.f32.xlu0 %v1991
      %v1993 = vpop.xlane.xlu0 %1992
      %v1994 = vsel %vm1858, %v1839, -inf
      %1995 = vmax.xlane.f32.xlu0 %v1994
      %v1996 = vpop.xlane.xlu0 %1995
      %v1997 = vsel %vm1858, %v1840, -inf
      %1998 = vmax.xlane.f32.xlu0 %v1997
      %v1999 = vpop.xlane.xlu0 %1998
      %v2000 = vsel %vm1858, %v1841, -inf
      %2001 = vmax.xlane.f32.xlu0 %v2000
      %v2002 = vpop.xlane.xlu0 %2001
      %v2003 = vsel %vm1858, %v1842, -inf
      %2004 = vmax.xlane.f32.xlu0 %v2003
      %v2005 = vpop.xlane.xlu0 %2004
      %v2006 = vsel %vm1858, %v1843, -inf
      %2007 = vmax.xlane.f32.xlu0 %v2006
      %v2008 = vpop.xlane.xlu0 %2007
      %v2009 = vsel %vm1858, %v1844, -inf
      %2010 = vmax.xlane.f32.xlu0 %v2009
      %v2011 = vpop.xlane.xlu0 %2010
      %v2012 = vsel %vm1858, %v1845, -inf
      %2013 = vmax.xlane.f32.xlu0 %v2012
      %v2014 = vpop.xlane.xlu0 %2013
      %v2015 = vsel %vm1858, %v1846, -inf
      %2016 = vmax.xlane.f32.xlu0 %v2015
      %v2017 = vpop.xlane.xlu0 %2016
      %v2018 = vsel %vm1858, %v1847, -inf
      %2019 = vmax.xlane.f32.xlu0 %v2018
      %v2020 = vpop.xlane.xlu0 %2019
      %v2021 = vsel %vm1858, %v1848, -inf
      %2022 = vmax.xlane.f32.xlu0 %v2021
      %v2023 = vpop.xlane.xlu0 %2022
      %v2024 = vsel %vm1858, %v1849, -inf
      %2025 = vmax.xlane.f32.xlu0 %v2024
      %v2026 = vpop.xlane.xlu0 %2025
      %v2027 = vsel %vm1858, %v1850, -inf
      %2028 = vmax.xlane.f32.xlu0 %v2027
      %v2029 = vpop.xlane.xlu0 %2028
      %v2030 = vsel %vm1858, %v1851, -inf
      %2031 = vmax.xlane.f32.xlu0 %v2030
      %v2032 = vpop.xlane.xlu0 %2031
      %v2033 = vsel %vm1858, %v1852, -inf
      %2034 = vmax.xlane.f32.xlu0 %v2033
      %v2035 = vpop.xlane.xlu0 %2034
      %v2036 = vsel %vm1858, %v1853, -inf
      %2037 = vmax.xlane.f32.xlu0 %v2036
      %v2038 = vpop.xlane.xlu0 %2037
      %v2039 = vsel %vm1858, %v1854, -inf
      %2040 = vmax.xlane.f32.xlu0 %v2039
      %v2041 = vpop.xlane.xlu0 %2040
      %v2042 = vsel %vm1858, %v1855, -inf
      %2043 = vmax.xlane.f32.xlu0 %v2042
      %v2044 = vpop.xlane.xlu0 %2043
      %v2045 = vsel %vm1858, %v1856, -inf
      %2046 = vmax.xlane.f32.xlu0 %v2045
      %v2047 = vpop.xlane.xlu0 %2046
      %v2048 = vsel %vm1858, %v1857, -inf
      %2049 = vmax.xlane.f32.xlu0 %v2048
      %v2050 = vpop.xlane.xlu0 %2049
      %v2051 = vsel %vm1858, %v1794, inf
      %2052 = vmin.xlane.f32.xlu0 %v2051
      %v2053 = vpop.xlane.xlu0 %2052
      %v2054 = vsel %vm1858, %v1795, inf
      %2055 = vmin.xlane.f32.xlu0 %v2054
      %v2056 = vpop.xlane.xlu0 %2055
      %v2057 = vsel %vm1858, %v1796, inf
      %2058 = vmin.xlane.f32.xlu0 %v2057
      %v2059 = vpop.xlane.xlu0 %2058
      %v2060 = vsel %vm1858, %v1797, inf
      %2061 = vmin.xlane.f32.xlu0 %v2060
      %v2062 = vpop.xlane.xlu0 %2061
      %v2063 = vsel %vm1858, %v1798, inf
      %2064 = vmin.xlane.f32.xlu0 %v2063
      %v2065 = vpop.xlane.xlu0 %2064
      %v2066 = vsel %vm1858, %v1799, inf
      %2067 = vmin.xlane.f32.xlu0 %v2066
      %v2068 = vpop.xlane.xlu0 %2067
      %v2069 = vsel %vm1858, %v1800, inf
      %2070 = vmin.xlane.f32.xlu0 %v2069
      %v2071 = vpop.xlane.xlu0 %2070
      %v2072 = vsel %vm1858, %v1801, inf
      %2073 = vmin.xlane.f32.xlu0 %v2072
      %v2074 = vpop.xlane.xlu0 %2073
      %v2075 = vsel %vm1858, %v1802, inf
      %2076 = vmin.xlane.f32.xlu0 %v2075
      %v2077 = vpop.xlane.xlu0 %2076
      %v2078 = vsel %vm1858, %v1803, inf
      %2079 = vmin.xlane.f32.xlu0 %v2078
      %v2080 = vpop.xlane.xlu0 %2079
      %v2081 = vsel %vm1858, %v1804, inf
      %2082 = vmin.xlane.f32.xlu0 %v2081
      %v2083 = vpop.xlane.xlu0 %2082
      %v2084 = vsel %vm1858, %v1805, inf
      %2085 = vmin.xlane.f32.xlu0 %v2084
      %v2086 = vpop.xlane.xlu0 %2085
      %v2087 = vsel %vm1858, %v1806, inf
      %2088 = vmin.xlane.f32.xlu0 %v2087
      %v2089 = vpop.xlane.xlu0 %2088
      %v2090 = vsel %vm1858, %v1807, inf
      %2091 = vmin.xlane.f32.xlu0 %v2090
      %v2092 = vpop.xlane.xlu0 %2091
      %v2093 = vsel %vm1858, %v1808, inf
      %2094 = vmin.xlane.f32.xlu0 %v2093
      %v2095 = vpop.xlane.xlu0 %2094
      %v2096 = vsel %vm1858, %v1809, inf
      %2097 = vmin.xlane.f32.xlu0 %v2096
      %v2098 = vpop.xlane.xlu0 %2097
      %v2099 = vsel %vm1858, %v1810, inf
      %2100 = vmin.xlane.f32.xlu0 %v2099
      %v2101 = vpop.xlane.xlu0 %2100
      %v2102 = vsel %vm1858, %v1811, inf
      %2103 = vmin.xlane.f32.xlu0 %v2102
      %v2104 = vpop.xlane.xlu0 %2103
      %v2105 = vsel %vm1858, %v1812, inf
      %2106 = vmin.xlane.f32.xlu0 %v2105
      %v2107 = vpop.xlane.xlu0 %2106
      %v2108 = vsel %vm1858, %v1813, inf
      %2109 = vmin.xlane.f32.xlu0 %v2108
      %v2110 = vpop.xlane.xlu0 %2109
      %v2111 = vsel %vm1858, %v1814, inf
      %2112 = vmin.xlane.f32.xlu0 %v2111
      %v2113 = vpop.xlane.xlu0 %2112
      %v2114 = vsel %vm1858, %v1815, inf
      %2115 = vmin.xlane.f32.xlu0 %v2114
      %v2116 = vpop.xlane.xlu0 %2115
      %v2117 = vsel %vm1858, %v1816, inf
      %2118 = vmin.xlane.f32.xlu0 %v2117
      %v2119 = vpop.xlane.xlu0 %2118
      %v2120 = vsel %vm1858, %v1817, inf
      %2121 = vmin.xlane.f32.xlu0 %v2120
      %v2122 = vpop.xlane.xlu0 %2121
      %v2123 = vsel %vm1858, %v1818, inf
      %2124 = vmin.xlane.f32.xlu0 %v2123
      %v2125 = vpop.xlane.xlu0 %2124
      %v2126 = vsel %vm1858, %v1819, inf
      %2127 = vmin.xlane.f32.xlu0 %v2126
      %v2128 = vpop.xlane.xlu0 %2127
      %v2129 = vsel %vm1858, %v1820, inf
      %2130 = vmin.xlane.f32.xlu0 %v2129
      %v2131 = vpop.xlane.xlu0 %2130
      %v2132 = vsel %vm1858, %v1821, inf
      %2133 = vmin.xlane.f32.xlu0 %v2132
      %v2134 = vpop.xlane.xlu0 %2133
      %v2135 = vsel %vm1858, %v1822, inf
      %2136 = vmin.xlane.f32.xlu0 %v2135
      %v2137 = vpop.xlane.xlu0 %2136
      %v2138 = vsel %vm1858, %v1823, inf
      %2139 = vmin.xlane.f32.xlu0 %v2138
      %v2140 = vpop.xlane.xlu0 %2139
      %v2141 = vsel %vm1858, %v1824, inf
      %2142 = vmin.xlane.f32.xlu0 %v2141
      %v2143 = vpop.xlane.xlu0 %2142
      %v2144 = vsel %vm1858, %v1825, inf
      %2145 = vmin.xlane.f32.xlu0 %v2144
      %v2146 = vpop.xlane.xlu0 %2145
      %v2147 = vsel %vm1858, %v1826, inf
      %2148 = vmin.xlane.f32.xlu0 %v2147
      %v2149 = vpop.xlane.xlu0 %2148
      %v2150 = vsel %vm1858, %v1827, inf
      %2151 = vmin.xlane.f32.xlu0 %v2150
      %v2152 = vpop.xlane.xlu0 %2151
      %v2153 = vsel %vm1858, %v1828, inf
      %2154 = vmin.xlane.f32.xlu0 %v2153
      %v2155 = vpop.xlane.xlu0 %2154
      %v2156 = vsel %vm1858, %v1829, inf
      %2157 = vmin.xlane.f32.xlu0 %v2156
      %v2158 = vpop.xlane.xlu0 %2157
      %v2159 = vsel %vm1858, %v1830, inf
      %2160 = vmin.xlane.f32.xlu0 %v2159
      %v2161 = vpop.xlane.xlu0 %2160
      %v2162 = vsel %vm1858, %v1831, inf
      %2163 = vmin.xlane.f32.xlu0 %v2162
      %v2164 = vpop.xlane.xlu0 %2163
      %v2165 = vsel %vm1858, %v1832, inf
      %2166 = vmin.xlane.f32.xlu0 %v2165
      %v2167 = vpop.xlane.xlu0 %2166
      %v2168 = vsel %vm1858, %v1833, inf
      %2169 = vmin.xlane.f32.xlu0 %v2168
      %v2170 = vpop.xlane.xlu0 %2169
      %v2171 = vsel %vm1858, %v1834, inf
      %2172 = vmin.xlane.f32.xlu0 %v2171
      %v2173 = vpop.xlane.xlu0 %2172
      %v2174 = vsel %vm1858, %v1835, inf
      %2175 = vmin.xlane.f32.xlu0 %v2174
      %v2176 = vpop.xlane.xlu0 %2175
      %v2177 = vsel %vm1858, %v1836, inf
      %2178 = vmin.xlane.f32.xlu0 %v2177
      %v2179 = vpop.xlane.xlu0 %2178
      %v2180 = vsel %vm1858, %v1837, inf
      %2181 = vmin.xlane.f32.xlu0 %v2180
      %v2182 = vpop.xlane.xlu0 %2181
      %v2183 = vsel %vm1858, %v1838, inf
      %2184 = vmin.xlane.f32.xlu0 %v2183
      %v2185 = vpop.xlane.xlu0 %2184
      %v2186 = vsel %vm1858, %v1839, inf
      %2187 = vmin.xlane.f32.xlu0 %v2186
      %v2188 = vpop.xlane.xlu0 %2187
      %v2189 = vsel %vm1858, %v1840, inf
      %2190 = vmin.xlane.f32.xlu0 %v2189
      %v2191 = vpop.xlane.xlu0 %2190
      %v2192 = vsel %vm1858, %v1841, inf
      %2193 = vmin.xlane.f32.xlu0 %v2192
      %v2194 = vpop.xlane.xlu0 %2193
      %v2195 = vsel %vm1858, %v1842, inf
      %2196 = vmin.xlane.f32.xlu0 %v2195
      %v2197 = vpop.xlane.xlu0 %2196
      %v2198 = vsel %vm1858, %v1843, inf
      %2199 = vmin.xlane.f32.xlu0 %v2198
      %v2200 = vpop.xlane.xlu0 %2199
      %v2201 = vsel %vm1858, %v1844, inf
      %2202 = vmin.xlane.f32.xlu0 %v2201
      %v2203 = vpop.xlane.xlu0 %2202
      %v2204 = vsel %vm1858, %v1845, inf
      %2205 = vmin.xlane.f32.xlu0 %v2204
      %v2206 = vpop.xlane.xlu0 %2205
      %v2207 = vsel %vm1858, %v1846, inf
      %2208 = vmin.xlane.f32.xlu0 %v2207
      %v2209 = vpop.xlane.xlu0 %2208
      %v2210 = vsel %vm1858, %v1847, inf
      %2211 = vmin.xlane.f32.xlu0 %v2210
      %v2212 = vpop.xlane.xlu0 %2211
      %v2213 = vsel %vm1858, %v1848, inf
      %2214 = vmin.xlane.f32.xlu0 %v2213
      %v2215 = vpop.xlane.xlu0 %2214
      %v2216 = vsel %vm1858, %v1849, inf
      %2217 = vmin.xlane.f32.xlu0 %v2216
      %v2218 = vpop.xlane.xlu0 %2217
      %v2219 = vsel %vm1858, %v1850, inf
      %2220 = vmin.xlane.f32.xlu0 %v2219
      %v2221 = vpop.xlane.xlu0 %2220
      %v2222 = vsel %vm1858, %v1851, inf
      %2223 = vmin.xlane.f32.xlu0 %v2222
      %v2224 = vpop.xlane.xlu0 %2223
      %v2225 = vsel %vm1858, %v1852, inf
      %2226 = vmin.xlane.f32.xlu0 %v2225
      %v2227 = vpop.xlane.xlu0 %2226
      %v2228 = vsel %vm1858, %v1853, inf
      %2229 = vmin.xlane.f32.xlu0 %v2228
      %v2230 = vpop.xlane.xlu0 %2229
      %v2231 = vsel %vm1858, %v1854, inf
      %2232 = vmin.xlane.f32.xlu0 %v2231
      %v2233 = vpop.xlane.xlu0 %2232
      %v2234 = vsel %vm1858, %v1855, inf
      %2235 = vmin.xlane.f32.xlu0 %v2234
      %v2236 = vpop.xlane.xlu0 %2235
      %v2237 = vsel %vm1858, %v1856, inf
      %2238 = vmin.xlane.f32.xlu0 %v2237
      %v2239 = vpop.xlane.xlu0 %2238
      %v2240 = vsel %vm1858, %v1857, inf
      %2241 = vmin.xlane.f32.xlu0 %v2240
      %v2242 = vpop.xlane.xlu0 %2241
      %vm2243 = vcmp.eq.s32.totalorder %v338, 0
      %v2244 = vsel %vm2243, %v1861, %v2053
      %v2245 = vsel %vm2243, %v1864, %v2056
      %v2246 = vsel %vm2243, %v1867, %v2059
      %v2247 = vsel %vm2243, %v1870, %v2062
      %v2248 = vsel %vm2243, %v1873, %v2065
      %v2249 = vsel %vm2243, %v1876, %v2068
      %v2250 = vsel %vm2243, %v1879, %v2071
      %v2251 = vsel %vm2243, %v1882, %v2074
      %v2252 = vsel %vm2243, %v1885, %v2077
      %v2253 = vsel %vm2243, %v1888, %v2080
      %v2254 = vsel %vm2243, %v1891, %v2083
      %v2255 = vsel %vm2243, %v1894, %v2086
      %v2256 = vsel %vm2243, %v1897, %v2089
      %v2257 = vsel %vm2243, %v1900, %v2092
      %v2258 = vsel %vm2243, %v1903, %v2095
      %v2259 = vsel %vm2243, %v1906, %v2098
      %v2260 = vsel %vm2243, %v1909, %v2101
      %v2261 = vsel %vm2243, %v1912, %v2104
      %v2262 = vsel %vm2243, %v1915, %v2107
      %v2263 = vsel %vm2243, %v1918, %v2110
      %v2264 = vsel %vm2243, %v1921, %v2113
      %v2265 = vsel %vm2243, %v1924, %v2116
      %v2266 = vsel %vm2243, %v1927, %v2119
      %v2267 = vsel %vm2243, %v1930, %v2122
      %v2268 = vsel %vm2243, %v1933, %v2125
      %v2269 = vsel %vm2243, %v1936, %v2128
      %v2270 = vsel %vm2243, %v1939, %v2131
      %v2271 = vsel %vm2243, %v1942, %v2134
      %v2272 = vsel %vm2243, %v1945, %v2137
      %v2273 = vsel %vm2243, %v1948, %v2140
      %v2274 = vsel %vm2243, %v1951, %v2143
      %v2275 = vsel %vm2243, %v1954, %v2146
      %v2276 = vsel %vm2243, %v1957, %v2149
      %v2277 = vsel %vm2243, %v1960, %v2152
      %v2278 = vsel %vm2243, %v1963, %v2155
      %v2279 = vsel %vm2243, %v1966, %v2158
      %v2280 = vsel %vm2243, %v1969, %v2161
      %v2281 = vsel %vm2243, %v1972, %v2164
      %v2282 = vsel %vm2243, %v1975, %v2167
      %v2283 = vsel %vm2243, %v1978, %v2170
      %v2284 = vsel %vm2243, %v1981, %v2173
      %v2285 = vsel %vm2243, %v1984, %v2176
      %v2286 = vsel %vm2243, %v1987, %v2179
      %v2287 = vsel %vm2243, %v1990, %v2182
      %v2288 = vsel %vm2243, %v1993, %v2185
      %v2289 = vsel %vm2243, %v1996, %v2188
      %v2290 = vsel %vm2243, %v1999, %v2191
      %v2291 = vsel %vm2243, %v2002, %v2194
      %v2292 = vsel %vm2243, %v2005, %v2197
      %v2293 = vsel %vm2243, %v2008, %v2200
      %v2294 = vsel %vm2243, %v2011, %v2203
      %v2295 = vsel %vm2243, %v2014, %v2206
      %v2296 = vsel %vm2243, %v2017, %v2209
      %v2297 = vsel %vm2243, %v2020, %v2212
      %v2298 = vsel %vm2243, %v2023, %v2215
      %v2299 = vsel %vm2243, %v2026, %v2218
      %v2300 = vsel %vm2243, %v2029, %v2221
      %v2301 = vsel %vm2243, %v2032, %v2224
      %v2302 = vsel %vm2243, %v2035, %v2227
      %v2303 = vsel %vm2243, %v2038, %v2230
      %v2304 = vsel %vm2243, %v2041, %v2233
      %v2305 = vsel %vm2243, %v2044, %v2236
      %v2306 = vsel %vm2243, %v2047, %v2239
      %v2307 = vsel %vm2243, %v2050, %v2242
      %v2308 = vld [vmem:[%s336] sm:$0xff]
      %v2309 = vld [vmem:[%s336 + $0x8] sm:$0xff]
      %v2310 = vld [vmem:[%s336 + $0x10] sm:$0xff]
      %v2311 = vld [vmem:[%s336 + $0x18] sm:$0xff]
      %v2312 = vld [vmem:[%s336 + $0x20] sm:$0xff]
      %v2313 = vld [vmem:[%s336 + $0x28] sm:$0xff]
      %v2314 = vld [vmem:[%s336 + $0x30] sm:$0xff]
      %v2315 = vld [vmem:[%s336 + $0x38] sm:$0xff]
      %v2316 = vld [vmem:[%s336 + $0x40] sm:$0xff]
      %v2317 = vld [vmem:[%s336 + $0x48] sm:$0xff]
      %v2318 = vld [vmem:[%s336 + $0x50] sm:$0xff]
      %v2319 = vld [vmem:[%s336 + $0x58] sm:$0xff]
      %v2320 = vld [vmem:[%s336 + $0x60] sm:$0xff]
      %v2321 = vld [vmem:[%s336 + $0x68] sm:$0xff]
      %v2322 = vld [vmem:[%s336 + $0x70] sm:$0xff]
      %v2323 = vld [vmem:[%s336 + $0x78] sm:$0xff]
      %v2324 = vld [vmem:[%s336 + $0x80] sm:$0xff]
      %v2325 = vld [vmem:[%s336 + $0x88] sm:$0xff]
      %v2326 = vld [vmem:[%s336 + $0x90] sm:$0xff]
      %v2327 = vld [vmem:[%s336 + $0x98] sm:$0xff]
      %v2328 = vld [vmem:[%s336 + $0xa0] sm:$0xff]
      %v2329 = vld [vmem:[%s336 + $0xa8] sm:$0xff]
      %v2330 = vld [vmem:[%s336 + $0xb0] sm:$0xff]
      %v2331 = vld [vmem:[%s336 + $0xb8] sm:$0xff]
      %v2332 = vld [vmem:[%s336 + $0xc0] sm:$0xff]
      %v2333 = vld [vmem:[%s336 + $0xc8] sm:$0xff]
      %v2334 = vld [vmem:[%s336 + $0xd0] sm:$0xff]
      %v2335 = vld [vmem:[%s336 + $0xd8] sm:$0xff]
      %v2336 = vld [vmem:[%s336 + $0xe0] sm:$0xff]
      %v2337 = vld [vmem:[%s336 + $0xe8] sm:$0xff]
      %v2338 = vld [vmem:[%s336 + $0xf0] sm:$0xff]
      %v2339 = vld [vmem:[%s336 + $0xf8] sm:$0xff]
      %v2340 = vld [vmem:[%s336 + $0x100] sm:$0xff]
      %v2341 = vld [vmem:[%s336 + $0x108] sm:$0xff]
      %v2342 = vld [vmem:[%s336 + $0x110] sm:$0xff]
      %v2343 = vld [vmem:[%s336 + $0x118] sm:$0xff]
      %v2344 = vld [vmem:[%s336 + $0x120] sm:$0xff]
      %v2345 = vld [vmem:[%s336 + $0x128] sm:$0xff]
      %v2346 = vld [vmem:[%s336 + $0x130] sm:$0xff]
      %v2347 = vld [vmem:[%s336 + $0x138] sm:$0xff]
      %v2348 = vld [vmem:[%s336 + $0x140] sm:$0xff]
      %v2349 = vld [vmem:[%s336 + $0x148] sm:$0xff]
      %v2350 = vld [vmem:[%s336 + $0x150] sm:$0xff]
      %v2351 = vld [vmem:[%s336 + $0x158] sm:$0xff]
      %v2352 = vld [vmem:[%s336 + $0x160] sm:$0xff]
      %v2353 = vld [vmem:[%s336 + $0x168] sm:$0xff]
      %v2354 = vld [vmem:[%s336 + $0x170] sm:$0xff]
      %v2355 = vld [vmem:[%s336 + $0x178] sm:$0xff]
      %v2356 = vld [vmem:[%s336 + $0x180] sm:$0xff]
      %v2357 = vld [vmem:[%s336 + $0x188] sm:$0xff]
      %v2358 = vld [vmem:[%s336 + $0x190] sm:$0xff]
      %v2359 = vld [vmem:[%s336 + $0x198] sm:$0xff]
      %v2360 = vld [vmem:[%s336 + $0x1a0] sm:$0xff]
      %v2361 = vld [vmem:[%s336 + $0x1a8] sm:$0xff]
      %v2362 = vld [vmem:[%s336 + $0x1b0] sm:$0xff]
      %v2363 = vld [vmem:[%s336 + $0x1b8] sm:$0xff]
      %v2364 = vld [vmem:[%s336 + $0x1c0] sm:$0xff]
      %v2365 = vld [vmem:[%s336 + $0x1c8] sm:$0xff]
      %v2366 = vld [vmem:[%s336 + $0x1d0] sm:$0xff]
      %v2367 = vld [vmem:[%s336 + $0x1d8] sm:$0xff]
      %v2368 = vld [vmem:[%s336 + $0x1e0] sm:$0xff]
      %v2369 = vld [vmem:[%s336 + $0x1e8] sm:$0xff]
      %v2370 = vld [vmem:[%s336 + $0x1f0] sm:$0xff]
      %v2371 = vld [vmem:[%s336 + $0x1f8] sm:$0xff]
      %v2372 = vmax.f32 %v2308, %v2244
      %v2373 = vmax.f32 %v2309, %v2245
      %v2374 = vmax.f32 %v2310, %v2246
      %v2375 = vmax.f32 %v2311, %v2247
      %v2376 = vmax.f32 %v2312, %v2248
      %v2377 = vmax.f32 %v2313, %v2249
      %v2378 = vmax.f32 %v2314, %v2250
      %v2379 = vmax.f32 %v2315, %v2251
      %v2380 = vmax.f32 %v2316, %v2252
      %v2381 = vmax.f32 %v2317, %v2253
      %v2382 = vmax.f32 %v2318, %v2254
      %v2383 = vmax.f32 %v2319, %v2255
      %v2384 = vmax.f32 %v2320, %v2256
      %v2385 = vmax.f32 %v2321, %v2257
      %v2386 = vmax.f32 %v2322, %v2258
      %v2387 = vmax.f32 %v2323, %v2259
      %v2388 = vmax.f32 %v2324, %v2260
      %v2389 = vmax.f32 %v2325, %v2261
      %v2390 = vmax.f32 %v2326, %v2262
      %v2391 = vmax.f32 %v2327, %v2263
      %v2392 = vmax.f32 %v2328, %v2264
      %v2393 = vmax.f32 %v2329, %v2265
      %v2394 = vmax.f32 %v2330, %v2266
      %v2395 = vmax.f32 %v2331, %v2267
      %v2396 = vmax.f32 %v2332, %v2268
      %v2397 = vmax.f32 %v2333, %v2269
      %v2398 = vmax.f32 %v2334, %v2270
      %v2399 = vmax.f32 %v2335, %v2271
      %v2400 = vmax.f32 %v2336, %v2272
      %v2401 = vmax.f32 %v2337, %v2273
      %v2402 = vmax.f32 %v2338, %v2274
      %v2403 = vmax.f32 %v2339, %v2275
      %v2404 = vmax.f32 %v2340, %v2276
      %v2405 = vmax.f32 %v2341, %v2277
      %v2406 = vmax.f32 %v2342, %v2278
      %v2407 = vmax.f32 %v2343, %v2279
      %v2408 = vmax.f32 %v2344, %v2280
      %v2409 = vmax.f32 %v2345, %v2281
      %v2410 = vmax.f32 %v2346, %v2282
      %v2411 = vmax.f32 %v2347, %v2283
      %v2412 = vmax.f32 %v2348, %v2284
      %v2413 = vmax.f32 %v2349, %v2285
      %v2414 = vmax.f32 %v2350, %v2286
      %v2415 = vmax.f32 %v2351, %v2287
      %v2416 = vmax.f32 %v2352, %v2288
      %v2417 = vmax.f32 %v2353, %v2289
      %v2418 = vmax.f32 %v2354, %v2290
      %v2419 = vmax.f32 %v2355, %v2291
      %v2420 = vmax.f32 %v2356, %v2292
      %v2421 = vmax.f32 %v2357, %v2293
      %v2422 = vmax.f32 %v2358, %v2294
      %v2423 = vmax.f32 %v2359, %v2295
      %v2424 = vmax.f32 %v2360, %v2296
      %v2425 = vmax.f32 %v2361, %v2297
      %v2426 = vmax.f32 %v2362, %v2298
      %v2427 = vmax.f32 %v2363, %v2299
      %v2428 = vmax.f32 %v2364, %v2300
      %v2429 = vmax.f32 %v2365, %v2301
      %v2430 = vmax.f32 %v2366, %v2302
      %v2431 = vmax.f32 %v2367, %v2303
      %v2432 = vmax.f32 %v2368, %v2304
      %v2433 = vmax.f32 %v2369, %v2305
      %v2434 = vmax.f32 %v2370, %v2306
      %v2435 = vmax.f32 %v2371, %v2307
      %v2436 = vmin.f32 %v2308, %v2244
      %v2437 = vmin.f32 %v2309, %v2245
      %v2438 = vmin.f32 %v2310, %v2246
      %v2439 = vmin.f32 %v2311, %v2247
      %v2440 = vmin.f32 %v2312, %v2248
      %v2441 = vmin.f32 %v2313, %v2249
      %v2442 = vmin.f32 %v2314, %v2250
      %v2443 = vmin.f32 %v2315, %v2251
      %v2444 = vmin.f32 %v2316, %v2252
      %v2445 = vmin.f32 %v2317, %v2253
      %v2446 = vmin.f32 %v2318, %v2254
      %v2447 = vmin.f32 %v2319, %v2255
      %v2448 = vmin.f32 %v2320, %v2256
      %v2449 = vmin.f32 %v2321, %v2257
      %v2450 = vmin.f32 %v2322, %v2258
      %v2451 = vmin.f32 %v2323, %v2259
      %v2452 = vmin.f32 %v2324, %v2260
      %v2453 = vmin.f32 %v2325, %v2261
      %v2454 = vmin.f32 %v2326, %v2262
      %v2455 = vmin.f32 %v2327, %v2263
      %v2456 = vmin.f32 %v2328, %v2264
      %v2457 = vmin.f32 %v2329, %v2265
      %v2458 = vmin.f32 %v2330, %v2266
      %v2459 = vmin.f32 %v2331, %v2267
      %v2460 = vmin.f32 %v2332, %v2268
      %v2461 = vmin.f32 %v2333, %v2269
      %v2462 = vmin.f32 %v2334, %v2270
      %v2463 = vmin.f32 %v2335, %v2271
      %v2464 = vmin.f32 %v2336, %v2272
      %v2465 = vmin.f32 %v2337, %v2273
      %v2466 = vmin.f32 %v2338, %v2274
      %v2467 = vmin.f32 %v2339, %v2275
      %v2468 = vmin.f32 %v2340, %v2276
      %v2469 = vmin.f32 %v2341, %v2277
      %v2470 = vmin.f32 %v2342, %v2278
      %v2471 = vmin.f32 %v2343, %v2279
      %v2472 = vmin.f32 %v2344, %v2280
      %v2473 = vmin.f32 %v2345, %v2281
      %v2474 = vmin.f32 %v2346, %v2282
      %v2475 = vmin.f32 %v2347, %v2283
      %v2476 = vmin.f32 %v2348, %v2284
      %v2477 = vmin.f32 %v2349, %v2285
      %v2478 = vmin.f32 %v2350, %v2286
      %v2479 = vmin.f32 %v2351, %v2287
      %v2480 = vmin.f32 %v2352, %v2288
      %v2481 = vmin.f32 %v2353, %v2289
      %v2482 = vmin.f32 %v2354, %v2290
      %v2483 = vmin.f32 %v2355, %v2291
      %v2484 = vmin.f32 %v2356, %v2292
      %v2485 = vmin.f32 %v2357, %v2293
      %v2486 = vmin.f32 %v2358, %v2294
      %v2487 = vmin.f32 %v2359, %v2295
      %v2488 = vmin.f32 %v2360, %v2296
      %v2489 = vmin.f32 %v2361, %v2297
      %v2490 = vmin.f32 %v2362, %v2298
      %v2491 = vmin.f32 %v2363, %v2299
      %v2492 = vmin.f32 %v2364, %v2300
      %v2493 = vmin.f32 %v2365, %v2301
      %v2494 = vmin.f32 %v2366, %v2302
      %v2495 = vmin.f32 %v2367, %v2303
      %v2496 = vmin.f32 %v2368, %v2304
      %v2497 = vmin.f32 %v2369, %v2305
      %v2498 = vmin.f32 %v2370, %v2306
      %v2499 = vmin.f32 %v2371, %v2307
      %v2500 = vsel %vm2243, %v2372, %v2436
      %v2501 = vsel %vm2243, %v2373, %v2437
      %v2502 = vsel %vm2243, %v2374, %v2438
      %v2503 = vsel %vm2243, %v2375, %v2439
      %v2504 = vsel %vm2243, %v2376, %v2440
      %v2505 = vsel %vm2243, %v2377, %v2441
      %v2506 = vsel %vm2243, %v2378, %v2442
      %v2507 = vsel %vm2243, %v2379, %v2443
      %v2508 = vsel %vm2243, %v2380, %v2444
      %v2509 = vsel %vm2243, %v2381, %v2445
      %v2510 = vsel %vm2243, %v2382, %v2446
      %v2511 = vsel %vm2243, %v2383, %v2447
      %v2512 = vsel %vm2243, %v2384, %v2448
      %v2513 = vsel %vm2243, %v2385, %v2449
      %v2514 = vsel %vm2243, %v2386, %v2450
      %v2515 = vsel %vm2243, %v2387, %v2451
      %v2516 = vsel %vm2243, %v2388, %v2452
      %v2517 = vsel %vm2243, %v2389, %v2453
      %v2518 = vsel %vm2243, %v2390, %v2454
      %v2519 = vsel %vm2243, %v2391, %v2455
      %v2520 = vsel %vm2243, %v2392, %v2456
      %v2521 = vsel %vm2243, %v2393, %v2457
      %v2522 = vsel %vm2243, %v2394, %v2458
      %v2523 = vsel %vm2243, %v2395, %v2459
      %v2524 = vsel %vm2243, %v2396, %v2460
      %v2525 = vsel %vm2243, %v2397, %v2461
      %v2526 = vsel %vm2243, %v2398, %v2462
      %v2527 = vsel %vm2243, %v2399, %v2463
      %v2528 = vsel %vm2243, %v2400, %v2464
      %v2529 = vsel %vm2243, %v2401, %v2465
      %v2530 = vsel %vm2243, %v2402, %v2466
      %v2531 = vsel %vm2243, %v2403, %v2467
      %v2532 = vsel %vm2243, %v2404, %v2468
      %v2533 = vsel %vm2243, %v2405, %v2469
      %v2534 = vsel %vm2243, %v2406, %v2470
      %v2535 = vsel %vm2243, %v2407, %v2471
      %v2536 = vsel %vm2243, %v2408, %v2472
      %v2537 = vsel %vm2243, %v2409, %v2473
      %v2538 = vsel %vm2243, %v2410, %v2474
      %v2539 = vsel %vm2243, %v2411, %v2475
      %v2540 = vsel %vm2243, %v2412, %v2476
      %v2541 = vsel %vm2243, %v2413, %v2477
      %v2542 = vsel %vm2243, %v2414, %v2478
      %v2543 = vsel %vm2243, %v2415, %v2479
      %v2544 = vsel %vm2243, %v2416, %v2480
      %v2545 = vsel %vm2243, %v2417, %v2481
      %v2546 = vsel %vm2243, %v2418, %v2482
      %v2547 = vsel %vm2243, %v2419, %v2483
      %v2548 = vsel %vm2243, %v2420, %v2484
      %v2549 = vsel %vm2243, %v2421, %v2485
      %v2550 = vsel %vm2243, %v2422, %v2486
      %v2551 = vsel %vm2243, %v2423, %v2487
      %v2552 = vsel %vm2243, %v2424, %v2488
      %v2553 = vsel %vm2243, %v2425, %v2489
      %v2554 = vsel %vm2243, %v2426, %v2490
      %v2555 = vsel %vm2243, %v2427, %v2491
      %v2556 = vsel %vm2243, %v2428, %v2492
      %v2557 = vsel %vm2243, %v2429, %v2493
      %v2558 = vsel %vm2243, %v2430, %v2494
      %v2559 = vsel %vm2243, %v2431, %v2495
      %v2560 = vsel %vm2243, %v2432, %v2496
      %v2561 = vsel %vm2243, %v2433, %v2497
      %v2562 = vsel %vm2243, %v2434, %v2498
      %v2563 = vsel %vm2243, %v2435, %v2499
      %vm2564 = vcmask 15360
      %2565 = vst.msk [vmem:[%s336] sm:$0xff] %vm2564, %v2500
      %2566 = vst.msk [vmem:[%s336 + $0x8] sm:$0xff] %vm2564, %v2501
      %2567 = vst.msk [vmem:[%s336 + $0x10] sm:$0xff] %vm2564, %v2502
      %2568 = vst.msk [vmem:[%s336 + $0x18] sm:$0xff] %vm2564, %v2503
      %2569 = vst.msk [vmem:[%s336 + $0x20] sm:$0xff] %vm2564, %v2504
      %2570 = vst.msk [vmem:[%s336 + $0x28] sm:$0xff] %vm2564, %v2505
      %2571 = vst.msk [vmem:[%s336 + $0x30] sm:$0xff] %vm2564, %v2506
      %2572 = vst.msk [vmem:[%s336 + $0x38] sm:$0xff] %vm2564, %v2507
      %2573 = vst.msk [vmem:[%s336 + $0x40] sm:$0xff] %vm2564, %v2508
      %2574 = vst.msk [vmem:[%s336 + $0x48] sm:$0xff] %vm2564, %v2509
      %2575 = vst.msk [vmem:[%s336 + $0x50] sm:$0xff] %vm2564, %v2510
      %2576 = vst.msk [vmem:[%s336 + $0x58] sm:$0xff] %vm2564, %v2511
      %2577 = vst.msk [vmem:[%s336 + $0x60] sm:$0xff] %vm2564, %v2512
      %2578 = vst.msk [vmem:[%s336 + $0x68] sm:$0xff] %vm2564, %v2513
      %2579 = vst.msk [vmem:[%s336 + $0x70] sm:$0xff] %vm2564, %v2514
      %2580 = vst.msk [vmem:[%s336 + $0x78] sm:$0xff] %vm2564, %v2515
      %2581 = vst.msk [vmem:[%s336 + $0x80] sm:$0xff] %vm2564, %v2516
      %2582 = vst.msk [vmem:[%s336 + $0x88] sm:$0xff] %vm2564, %v2517
      %2583 = vst.msk [vmem:[%s336 + $0x90] sm:$0xff] %vm2564, %v2518
      %2584 = vst.msk [vmem:[%s336 + $0x98] sm:$0xff] %vm2564, %v2519
      %2585 = vst.msk [vmem:[%s336 + $0xa0] sm:$0xff] %vm2564, %v2520
      %2586 = vst.msk [vmem:[%s336 + $0xa8] sm:$0xff] %vm2564, %v2521
      %2587 = vst.msk [vmem:[%s336 + $0xb0] sm:$0xff] %vm2564, %v2522
      %2588 = vst.msk [vmem:[%s336 + $0xb8] sm:$0xff] %vm2564, %v2523
      %2589 = vst.msk [vmem:[%s336 + $0xc0] sm:$0xff] %vm2564, %v2524
      %2590 = vst.msk [vmem:[%s336 + $0xc8] sm:$0xff] %vm2564, %v2525
      %2591 = vst.msk [vmem:[%s336 + $0xd0] sm:$0xff] %vm2564, %v2526
      %2592 = vst.msk [vmem:[%s336 + $0xd8] sm:$0xff] %vm2564, %v2527
      %2593 = vst.msk [vmem:[%s336 + $0xe0] sm:$0xff] %vm2564, %v2528
      %2594 = vst.msk [vmem:[%s336 + $0xe8] sm:$0xff] %vm2564, %v2529
      %2595 = vst.msk [vmem:[%s336 + $0xf0] sm:$0xff] %vm2564, %v2530
      %2596 = vst.msk [vmem:[%s336 + $0xf8] sm:$0xff] %vm2564, %v2531
      %2597 = vst.msk [vmem:[%s336 + $0x100] sm:$0xff] %vm2564, %v2532
      %2598 = vst.msk [vmem:[%s336 + $0x108] sm:$0xff] %vm2564, %v2533
      %2599 = vst.msk [vmem:[%s336 + $0x110] sm:$0xff] %vm2564, %v2534
      %2600 = vst.msk [vmem:[%s336 + $0x118] sm:$0xff] %vm2564, %v2535
      %2601 = vst.msk [vmem:[%s336 + $0x120] sm:$0xff] %vm2564, %v2536
      %2602 = vst.msk [vmem:[%s336 + $0x128] sm:$0xff] %vm2564, %v2537
      %2603 = vst.msk [vmem:[%s336 + $0x130] sm:$0xff] %vm2564, %v2538
      %2604 = vst.msk [vmem:[%s336 + $0x138] sm:$0xff] %vm2564, %v2539
      %2605 = vst.msk [vmem:[%s336 + $0x140] sm:$0xff] %vm2564, %v2540
      %2606 = vst.msk [vmem:[%s336 + $0x148] sm:$0xff] %vm2564, %v2541
      %2607 = vst.msk [vmem:[%s336 + $0x150] sm:$0xff] %vm2564, %v2542
      %2608 = vst.msk [vmem:[%s336 + $0x158] sm:$0xff] %vm2564, %v2543
      %2609 = vst.msk [vmem:[%s336 + $0x160] sm:$0xff] %vm2564, %v2544
      %2610 = vst.msk [vmem:[%s336 + $0x168] sm:$0xff] %vm2564, %v2545
      %2611 = vst.msk [vmem:[%s336 + $0x170] sm:$0xff] %vm2564, %v2546
      %2612 = vst.msk [vmem:[%s336 + $0x178] sm:$0xff] %vm2564, %v2547
      %2613 = vst.msk [vmem:[%s336 + $0x180] sm:$0xff] %vm2564, %v2548
      %2614 = vst.msk [vmem:[%s336 + $0x188] sm:$0xff] %vm2564, %v2549
      %2615 = vst.msk [vmem:[%s336 + $0x190] sm:$0xff] %vm2564, %v2550
      %2616 = vst.msk [vmem:[%s336 + $0x198] sm:$0xff] %vm2564, %v2551
      %2617 = vst.msk [vmem:[%s336 + $0x1a0] sm:$0xff] %vm2564, %v2552
      %2618 = vst.msk [vmem:[%s336 + $0x1a8] sm:$0xff] %vm2564, %v2553
      %2619 = vst.msk [vmem:[%s336 + $0x1b0] sm:$0xff] %vm2564, %v2554
      %2620 = vst.msk [vmem:[%s336 + $0x1b8] sm:$0xff] %vm2564, %v2555
      %2621 = vst.msk [vmem:[%s336 + $0x1c0] sm:$0xff] %vm2564, %v2556
      %2622 = vst.msk [vmem:[%s336 + $0x1c8] sm:$0xff] %vm2564, %v2557
      %2623 = vst.msk [vmem:[%s336 + $0x1d0] sm:$0xff] %vm2564, %v2558
      %2624 = vst.msk [vmem:[%s336 + $0x1d8] sm:$0xff] %vm2564, %v2559
      %2625 = vst.msk [vmem:[%s336 + $0x1e0] sm:$0xff] %vm2564, %v2560
      %2626 = vst.msk [vmem:[%s336 + $0x1e8] sm:$0xff] %vm2564, %v2561
      %2627 = vst.msk [vmem:[%s336 + $0x1f0] sm:$0xff] %vm2564, %v2562
      %2628 = vst.msk [vmem:[%s336 + $0x1f8] sm:$0xff] %vm2564, %v2563
      %p2629 = scmp.lt.s32.totalorder %s23, 1
      %s2630 = scalar_select %p2629, %s23, 1
      %p2631 = scmp.lt.s32.totalorder %s24, 0
      %s2632 = scalar_select %p2631, %s24, 0
      %s2633 = smul.addr %s2632, 64
      %s2634 = smul.addr %s2630, 64
      %s2635 = sadd.s32 %s2633, %s2634
      %s2636 = smul.addr %s2635, 8
      %s2637 = scalar_lea.vmem %s7, %s2636
      // Predicated region
      $region53: #{tpu_custom_call.1} parent=47 // pred_check
        %p2638 = pneg %p217
      $region54: #{tpu_custom_call.1} parent=47 // pred_check_branch
        %2640 = sbr.rel (%p2638) target = $region56
      $region55: #{tpu_custom_call.1} parent=47 // pred_region
        _
      $region56: #{tpu_custom_call.1} parent=47 // pred_fallthru
        _
    $region48: #{tpu_custom_call.1} parent=5 // pred_fallthru
      _
    %p2641 = scmp.le.s32.totalorder 2, %s13
    // Predicated region
    $region57: #{tpu_custom_call.1} parent=5 // pred_check
      %p2642 = pneg %p2641
    $region58: #{tpu_custom_call.1} parent=5 // pred_check_branch
      %2644 = sbr.rel (%p2642) target = $region60
    $region59: #{tpu_custom_call.1} parent=5 // pred_region
      %s2645 = ssub.s32 %s13, 2
      // Predicated region
      $region61: #{tpu_custom_call.1} parent=59 // pred_check
        %p2646 = pneg %p223
      $region62: #{tpu_custom_call.1} parent=59 // pred_check_branch
        %2648 = sbr.rel (%p2646) target = $region64
      $region63: #{tpu_custom_call.1} parent=59 // pred_region
        %p2649 = scmp.lt.s32.totalorder %s26, 1
        %s2650 = scalar_select %p2649, %s26, 1
        %p2651 = scmp.lt.s32.totalorder %s27, 0
        %s2652 = scalar_select %p2651, %s27, 0
        %s2653 = smul.addr %s2652, 64
        %s2654 = smul.addr %s2650, 64
        %s2655 = sadd.s32 %s2653, %s2654
        %s2656 = smul.addr %s2655, 8
        %s2657 = scalar_lea.vmem %s7, %s2656
      $region64: #{tpu_custom_call.1} parent=59 // pred_fallthru
        _
    $region60: #{tpu_custom_call.1} parent=5 // pred_fallthru
      _
  $region6: #{tpu_custom_call.1} parent=0 // loop_footer
    %s17 = sadd.s32 1, %s13
  $region7: #{tpu_custom_call.1} parent=0 // loop_footer_branch
    %12 = sbr.rel target = $region3
  $region8: #{tpu_custom_call.1} parent=0 // loop_exit
    _

</llo_original>
